<compile_context>
chip_gen: v5e
topology: v5e:2x2
jax: 0.10.0
libtpu: 0.0.40
codegen_flags: <defaults>
</compile_context>

<pallas_src>
import numpy as np
import jax
import jax.numpy as jnp
from jax.experimental import pallas as pl
from jax.experimental.pallas import tpu as pltpu


# --------------------------------------------------------------------------
# Batch-invariant per-AGCN-block parameter prep (runs once in XLA)
# --------------------------------------------------------------------------
def _prep_block(p, E, Ci, H, d, Dout):
    Din = Ci + H
    LY = d * Dout
    a = p['a'][0, 0].astype(jnp.float32)
    b = p['b'][0, 0].astype(jnp.float32)

    # weights_pool (d, cheb_k=2, Din, Dout) -> per-k flat (Din, d*Dout):
    #   W_k[i, dd*Dout + o] = wp[dd, k, i, o]
    def flat(k):
        return jnp.transpose(p['wp'][:, k, :, :], (1, 0, 2)).reshape(Din, LY)

    w0, w1 = flat(0), flat(1)
    wdg = p['Wdg'] * b                       # fold the 'b' mixing scalar
    fc1w = p['fc1w']
    cols = LY + Din + Dout                   # lane sections: [Y | h1 | p]

    # x-side slab: LHS row groups [x | adj@x | AG@x], Ci rows each
    WX = (jnp.zeros((3 * Ci, cols), jnp.float32)
          .at[0:Ci, 0:LY].set(w0[:Ci])
          .at[2 * Ci:3 * Ci, 0:LY].set(w1[:Ci])
          .at[Ci:2 * Ci, LY:LY + Din].set(fc1w[:Ci])
          .at[0:Ci, LY + Din:].set(wdg[:Ci]))
    # state-side slab: LHS row groups [xs | adj@xs | AG@xs], H rows each
    WS = (jnp.zeros((3 * H, cols), jnp.float32)
          .at[0:H, 0:LY].set(w0[Ci:])
          .at[2 * H:3 * H, 0:LY].set(w1[Ci:])
          .at[H:2 * H, LY:LY + Din].set(fc1w[Ci:])
          .at[0:H, LY + Din:].set(wdg[Ci:]))

    return dict(
        WX=WX, WS=WS,
        erep=jnp.repeat(E, Dout, axis=1),                           # (N, d*Dout)
        bias=(E @ p['bp']) * a,                                     # 'a' folded
        sel=jnp.tile(jnp.eye(Dout, dtype=jnp.float32), (d, 1)) * a,  # (d*Dout, Dout)
        f1b=p['fc1b'], f2w=p['fc2w'], f2b=p['fc2b'],
        f3w=p['fc3w'], f3b=p['fc3b'])


# --------------------------------------------------------------------------
# Wrapper + kernel
# --------------------------------------------------------------------------
def agcrn_cell_forward(x, state, E, TD, TW, gate_p, update_p,
                       use_day=True, use_week=True, max_block_rows=256):
    B, N, Ci = x.shape
    H = state.shape[-1]
    d = E.shape[-1]
    Din = Ci + H
    Dg, Du = 2 * H, H                         # gate / update output widths
    LYg, LYu = d * Dg, d * Du
    secg = LYg + Din + Dg                     # gate lane-section width
    secu = LYu + Din + Du                     # update lane-section width

    # ---- batch blocking: fuse as many batches per grid step as fits ----
    Bblk = max(1, min(B, max(1, max_block_rows // N)))
    while B % Bblk:
        Bblk -= 1
    BN = Bblk * N
    assert Bblk == B or BN % 8 == 0, "batch-block rows must be 8-aligned"

    # ---- batch-invariant graph structure (hoisted out of the kernel) ----
    adj = jax.nn.relu(jnp.tanh(3.0 * (E @ E.T)))          # AS == A_hat, symmetric
    # NOTE: matches the reference; a zero-degree node would give inf/NaN here.
    dinv = jax.lax.rsqrt(jnp.sum(adj, axis=-1))
    AG = dinv[:, None] * adj * dinv[None, :]
    eyeB = jnp.eye(Bblk, dtype=jnp.float32)
    G3 = jnp.concatenate(
        [jnp.kron(eyeB, adj),                              # block-diag A_hat
         jnp.kron(eyeB, AG),                               # block-diag laplacian
         jnp.kron(eyeB, jnp.ones((N, N), jnp.float32))],   # block-diag batch mask
        axis=0)                                            # (3*BN, BN)

    # ---- per-batch data packed into ONE input slab ----
    Et = E[None, :, :]
    if use_day:
        Et = Et * TD
    if use_week:
        Et = Et * TW
    Et = jnp.broadcast_to(Et, (B, N, d))
    xse = jnp.concatenate([x, state, Et], axis=-1).reshape(B * N, Ci + H + d)

    # ---- parameters packed into a handful of shared slabs ----
    gp = _prep_block(gate_p, E, Ci, H, d, Dg)
    up = _prep_block(update_p, E, Ci, H, d, Du)
    WX = jnp.concatenate([gp['WX'], up['WX']], axis=1)     # (3*Ci, secg+secu)
    WS = jnp.concatenate([gp['WS'], up['WS']], axis=1)     # (3*H,  secg+secu)

    Rfc = Din + d + 4
    Cfc = max(2 * d, Din)
    FC = jnp.zeros((Rfc, Cfc), jnp.float32)
    FC = FC.at[0:Din, 0:d].set(gp['f2w']).at[0:Din, d:2 * d].set(up['f2w'])
    FC = FC.at[Din:Din + d, 0:d].set(gp['f3w']).at[Din:Din + d, d:2 * d].set(up['f3w'])
    FC = FC.at[Din + d, 0:d].set(gp['f2b']).at[Din + d, d:2 * d].set(up['f2b'])
    FC = FC.at[Din + d + 1, 0:d].set(gp['f3b']).at[Din + d + 1, d:2 * d].set(up['f3b'])
    FC = FC.at[Din + d + 2, 0:Din].set(gp['f1b'])
    FC = FC.at[Din + d + 3, 0:Din].set(up['f1b'])

    def tile_b(m):                                         # (N, c) -> (BN, c)
        return jnp.tile(m, (Bblk, 1))
    NB = jnp.concatenate([tile_b(gp['erep']), tile_b(gp['bias']),
                          tile_b(up['erep']), tile_b(up['bias'])], axis=1)

    SEL = jnp.zeros((LYg, Dg + Du), jnp.float32)
    SEL = SEL.at[:, 0:Dg].set(gp['sel'])
    SEL = SEL.at[0:LYu, Dg:Dg + Du].set(up['sel'])

    # ---------------------------------------------------------------------
    def kernel(xse_ref, g3_ref, wx_ref, ws_ref, fc_ref, nb_ref, sel_ref, h_ref):
        xse_v = xse_ref[...]                               # (BN, Ci+H+d)
        xb = xse_v[:, 0:Ci]
        st = xse_v[:, Ci:Ci + H]
        Etb = xse_v[:, Ci + H:Ci + H + d]

        g3 = g3_ref[...]
        G2 = g3[0:2 * BN, :]                               # [adj_blk ; AG_blk]
        bmask = g3[2 * BN:3 * BN, :]                       # block-diag batch mask

        WXv = wx_ref[...]
        WSv = ws_ref[...]
        FCv = fc_ref[...]
        NBv = nb_ref[...]
        SELv = sel_ref[...]

        # fc tail params (value carves of the small packed slab)
        f2w_g = FCv[0:Din, 0:d];                 f2w_u = FCv[0:Din, d:2 * d]
        f3w_g = FCv[Din:Din + d, 0:d];           f3w_u = FCv[Din:Din + d, d:2 * d]
        f2b_g = FCv[Din + d:Din + d + 1, 0:d];   f2b_u = FCv[Din + d:Din + d + 1, d:2 * d]
        f3b_g = FCv[Din + d + 1:Din + d + 2, 0:d]
        f3b_u = FCv[Din + d + 1:Din + d + 2, d:2 * d]
        f1b_g = FCv[Din + d + 2:Din + d + 3, 0:Din]
        f1b_u = FCv[Din + d + 3:Din + d + 4, 0:Din]

        erep_g = NBv[:, 0:LYg]
        bias_g = NBv[:, LYg:LYg + Dg]
        erep_u = NBv[:, LYg + Dg:LYg + Dg + LYu]
        bias_u = NBv[:, LYg + Dg + LYu:LYg + Dg + LYu + Du]
        sel_g = SELv[:, 0:Dg]
        sel_u = SELv[0:LYu, Dg:Dg + Du]

        def dot(a, b):
            return jnp.dot(a, b, preferred_element_type=jnp.float32)

        # ---- x-side contributions, shared by the gate and update blocks ----
        gx = dot(G2, xb)                                   # [adj@x ; AG@x]  (2BN, Ci)
        xside = (dot(xb, WXv[0:Ci])
                 + dot(gx[0:BN], WXv[Ci:2 * Ci])
                 + dot(gx[BN:2 * BN], WXv[2 * Ci:3 * Ci]))  # (BN, secg+secu)

        def agcn_block(xs, s0, LY, Do, WSb, f1b, f2w, f2b, f3w, f3b, erep, bias, sel):
            # fused lane sections of this block: [Y-contrib | h1-contrib | p-contrib]
            Yx = xside[:, s0:s0 + LY]
            h1x = xside[:, s0 + LY:s0 + LY + Din]
            px = xside[:, s0 + LY + Din:s0 + LY + Din + Do]

            gs = dot(G2, xs)                               # [adj@xs ; AG@xs]
            sside = (dot(xs, WSb[0:H])
                     + dot(gs[0:BN], WSb[H:2 * H])
                     + dot(gs[BN:2 * BN], WSb[2 * H:3 * H]))
            Ys = sside[:, 0:LY]
            h1s = sside[:, LY:LY + Din]
            ps = sside[:, LY + Din:LY + Din + Do]

            # sgcn MLP -> DE -> DA (the serial critical path)
            h1 = jax.nn.sigmoid(h1x + h1s + f1b)
            h2 = jax.nn.sigmoid(dot(h1, f2w) + f2b)
            DF = dot(h2, f3w) + f3b
            DE = jnp.tanh(3.0 * Etb * DF)
            DA = bmask * jax.nn.relu(jnp.tanh(3.0 * jax.lax.dot_general(
                DE, DE, (((1,), (1,)), ((), ())),
                preferred_element_type=jnp.float32)))      # block-diag (BN, BN)

            # adaptive (weights-pool) conv; 'a' folded into bias/sel
            agconv = bias + dot(erep * (Yx + Ys), sel)
            # dynamic conv, reassociated: p first, then one post-DA matmul
            dgconv = dot(DA, px + ps)
            return agconv + dgconv

        z_r = jax.nn.sigmoid(agcn_block(st, 0, LYg, Dg, WSv[:, 0:secg],
                                        f1b_g, f2w_g, f2b_g, f3w_g, f3b_g,
                                        erep_g, bias_g, sel_g))
        z = z_r[:, 0:H]
        r = z_r[:, H:2 * H]
        hc = jnp.tanh(agcn_block(z * st, secg, LYu, Du, WSv[:, secg:secg + secu],
                                 f1b_u, f2w_u, f2b_u, f3w_u, f3b_u,
                                 erep_u, bias_u, sel_u))
        h_ref[...] = r * st + (1.0 - r) * hc
    # ---------------------------------------------------------------------

    ch = Ci + H + d
    out_flat = pl.pallas_call(
        kernel,
        out_shape=jax.ShapeDtypeStruct((B * N, H), jnp.float32),
        grid=(B // Bblk,),
        in_specs=[
            pl.BlockSpec((BN, ch), lambda i: (i, 0)),      # per-batch-block slab
            pl.BlockSpec(G3.shape, lambda i: (0, 0)),      # shared graph slab
            pl.BlockSpec(WX.shape, lambda i: (0, 0)),
            pl.BlockSpec(WS.shape, lambda i: (0, 0)),
            pl.BlockSpec(FC.shape, lambda i: (0, 0)),
            pl.BlockSpec(NB.shape, lambda i: (0, 0)),
            pl.BlockSpec(SEL.shape, lambda i: (0, 0)),
        ],
        out_specs=pl.BlockSpec((BN, H), lambda i: (i, 0)),
        compiler_params=pltpu.CompilerParams(
            dimension_semantics=("parallel",)),
    )(xse, G3, WX, WS, FC, NB, SEL)
    return out_flat.reshape(B, N, H)


# --------------------------------------------------------------------------
# Pure-JAX reference (mirrors the PyTorch module exactly)
# --------------------------------------------------------------------------
def agcn_ref(xin, E, TD, TW, p, use_day=True, use_week=True):
    AS = jax.nn.relu(jnp.tanh(3.0 * (E @ E.T)))
    dinv = jax.lax.rsqrt(jnp.sum(AS, axis=-1))
    AG = dinv[:, None] * AS * dinv[None, :]
    A_hat = AS
    Et = E[None, :, :]
    if use_day:
        Et = Et * TD
    if use_week:
        Et = Et * TW
    Et = jnp.broadcast_to(Et, (xin.shape[0],) + E.shape)
    h0 = jnp.einsum('bvc,vw->bwc', xin, A_hat)
    h1 = jax.nn.sigmoid(h0 @ p['fc1w'] + p['fc1b'])
    h2 = jax.nn.sigmoid(h1 @ p['fc2w'] + p['fc2b'])
    DF = h2 @ p['fc3w'] + p['fc3b']
    DE = jnp.tanh(3.0 * Et * DF)
    DA = jax.nn.relu(jnp.tanh(3.0 * jnp.einsum('bne,bme->bnm', DE, DE)))
    x_ag2 = jnp.einsum('nm,bmi->bni', AG, xin)
    x_ag = jnp.stack([xin, x_ag2], axis=2)                         # (b, n, k, i)
    weights = jnp.einsum('nd,dkio->nkio', E, p['wp'])
    bias = E @ p['bp']
    x_agconv = jnp.einsum('bnki,nkio->bno', x_ag, weights) + bias
    x_dg2 = jnp.einsum('bnm,bmi->bni', DA, xin)
    x_dgconv = x_dg2 @ p['Wdg']
    return p['a'] * x_agconv + p['b'] * x_dgconv


def agcrn_cell_ref(x, state, E, TD, TW, gate_p, update_p):
    H = state.shape[-1]
    ins = jnp.concatenate([x, state], axis=-1)
    z_r = jax.nn.sigmoid(agcn_ref(ins, E, TD, TW, gate_p))
    z, r = z_r[..., :H], z_r[..., H:]
    cand = jnp.concatenate([x, z * state], axis=-1)
    hc = jnp.tanh(agcn_ref(cand, E, TD, TW, update_p))
    return r * state + (1.0 - r) * hc


# --------------------------------------------------------------------------
# Deterministic parameter init (shapes from AGCN.__init__ / gcn.__init__)
# --------------------------------------------------------------------------
def init_agcn_params(key, Din, Dout, d):
    ks = jax.random.split(key, 12)

    def xav(k, shape, fi, fo):
        return np.sqrt(2.0 / (fi + fo)).astype(np.float32) * jax.random.normal(k, shape, jnp.float32)

    return {
        'wp':   xav(ks[0], (d, 2, Din, Dout), Din, Dout),   # weights_pool (embed, cheb_k=2, in, out)
        'bp':   xav(ks[1], (d, Dout), d, Dout),             # bias_pool
        'Wdg':  xav(ks[2], (Din, Dout), Din, Dout),
        'a':    jax.random.uniform(ks[3], (1, 1), jnp.float32),
        'b':    jax.random.uniform(ks[4], (1, 1), jnp.float32),
        'fc1w': xav(ks[5], (Din, Din), Din, Din),
        'fc1b': 0.01 * jax.random.normal(ks[6], (Din,), jnp.float32),
        'fc2w': xav(ks[7], (Din, d), Din, d),
        'fc2b': 0.01 * jax.random.normal(ks[8], (d,), jnp.float32),
        'fc3w': xav(ks[9], (d, d), d, d),
        'fc3b': 0.01 * jax.random.normal(ks[10], (d,), jnp.float32),
    }


if __name__ == "__main__":
    key = jax.random.PRNGKey(0)
    B, N, Ci, H, d = 2, 16, 2, 8, 8          # batch, node_num, dim_in, dim_out(hidden), embed_dim
    keys = jax.random.split(key, 7)

    x = jax.random.normal(keys[0], (B, N, Ci), jnp.float32)
    state = jax.random.normal(keys[1], (B, N, H), jnp.float32)
    E = 0.5 * jax.random.normal(keys[2], (N, d), jnp.float32)          # E_id_emb
    TD = 0.5 * jax.random.normal(keys[3], (B, N, d), jnp.float32)      # T_D_emb
    TW = 0.5 * jax.random.normal(keys[4], (B, N, d), jnp.float32)      # T_W_emb

    gate_p = init_agcn_params(keys[5], Ci + H, 2 * H, d)    # gate AGCN: dim_out = 2H
    update_p = init_agcn_params(keys[6], Ci + H, H, d)      # update AGCN: dim_out = H

    h = jax.jit(agcrn_cell_forward)(x, state, E, TD, TW, gate_p, update_p)
    h = jax.block_until_ready(h)

    h_ref = agcrn_cell_ref(x, state, E, TD, TW, gate_p, update_p)
    assert h.shape == (B, N, H)
    err = float(np.max(np.abs(np.asarray(h) - np.asarray(h_ref))))
    assert np.allclose(np.asarray(h), np.asarray(h_ref), atol=1e-2, rtol=1e-2), err

    print("KERNEL_OK")
</pallas_src>

<mosaic_0001>
module attributes {stable_mosaic.version = 11 : i64} {
  func.func @kernel(%arg0: i32, %arg1: memref<32x18xf32, #tpu.memory_space<vmem>>, %arg2: memref<96x32xf32, #tpu.memory_space<vmem>>, %arg3: memref<6x236xf32, #tpu.memory_space<vmem>>, %arg4: memref<24x236xf32, #tpu.memory_space<vmem>>, %arg5: memref<22x16xf32, #tpu.memory_space<vmem>>, %arg6: memref<32x216xf32, #tpu.memory_space<vmem>>, %arg7: memref<128x24xf32, #tpu.memory_space<vmem>>, %arg8: memref<32x8xf32, #tpu.memory_space<vmem>>) attributes {dimension_semantics = [#tpu.dimension_semantics<parallel>], iteration_bounds = array<i64: 1>, scalar_prefetch = 0 : i64, scratch_operands = 0 : i64, tpu.core_type = #tpu.core_type<tc>, window_params = [{transform_indices = @transform_0, window_bounds = array<i64: 32, 18>}, {pipeline_mode = #tpu.pipeline_mode<synchronous>, transform_indices = @transform_1, window_bounds = array<i64: 96, 32>}, {pipeline_mode = #tpu.pipeline_mode<synchronous>, transform_indices = @transform_2, window_bounds = array<i64: 6, 236>}, {pipeline_mode = #tpu.pipeline_mode<synchronous>, transform_indices = @transform_3, window_bounds = array<i64: 24, 236>}, {pipeline_mode = #tpu.pipeline_mode<synchronous>, transform_indices = @transform_4, window_bounds = array<i64: 22, 16>}, {pipeline_mode = #tpu.pipeline_mode<synchronous>, transform_indices = @transform_5, window_bounds = array<i64: 32, 216>}, {pipeline_mode = #tpu.pipeline_mode<synchronous>, transform_indices = @transform_6, window_bounds = array<i64: 128, 24>}, {transform_indices = @transform_7, window_bounds = array<i64: 32, 8>}]} {
    %c0 = arith.constant 0 : index
    %c0_0 = arith.constant 0 : index
    %0 = vector.load %arg1[%c0, %c0_0] : memref<32x18xf32, #tpu.memory_space<vmem>>, vector<32x18xf32>
    %1 = vector.extract_strided_slice %0 {offsets = [0, 0], sizes = [32, 2], strides = [1, 1]} : vector<32x18xf32> to vector<32x2xf32>
    %2 = vector.extract_strided_slice %0 {offsets = [0, 2], sizes = [32, 8], strides = [1, 1]} : vector<32x18xf32> to vector<32x8xf32>
    %3 = vector.extract_strided_slice %0 {offsets = [0, 10], sizes = [32, 8], strides = [1, 1]} : vector<32x18xf32> to vector<32x8xf32>
    %c0_1 = arith.constant 0 : index
    %c0_2 = arith.constant 0 : index
    %4 = vector.load %arg2[%c0_1, %c0_2] : memref<96x32xf32, #tpu.memory_space<vmem>>, vector<96x32xf32>
    %5 = vector.extract_strided_slice %4 {offsets = [0, 0], sizes = [64, 32], strides = [1, 1]} : vector<96x32xf32> to vector<64x32xf32>
    %6 = vector.extract_strided_slice %4 {offsets = [64, 0], sizes = [32, 32], strides = [1, 1]} : vector<96x32xf32> to vector<32x32xf32>
    %c0_3 = arith.constant 0 : index
    %c0_4 = arith.constant 0 : index
    %7 = vector.load %arg3[%c0_3, %c0_4] : memref<6x236xf32, #tpu.memory_space<vmem>>, vector<6x236xf32>
    %c0_5 = arith.constant 0 : index
    %c0_6 = arith.constant 0 : index
    %8 = vector.load %arg4[%c0_5, %c0_6] : memref<24x236xf32, #tpu.memory_space<vmem>>, vector<24x236xf32>
    %c0_7 = arith.constant 0 : index
    %c0_8 = arith.constant 0 : index
    %9 = vector.load %arg5[%c0_7, %c0_8] : memref<22x16xf32, #tpu.memory_space<vmem>>, vector<22x16xf32>
    %c0_9 = arith.constant 0 : index
    %c0_10 = arith.constant 0 : index
    %10 = vector.load %arg6[%c0_9, %c0_10] : memref<32x216xf32, #tpu.memory_space<vmem>>, vector<32x216xf32>
    %c0_11 = arith.constant 0 : index
    %c0_12 = arith.constant 0 : index
    %11 = vector.load %arg7[%c0_11, %c0_12] : memref<128x24xf32, #tpu.memory_space<vmem>>, vector<128x24xf32>
    %12 = vector.extract_strided_slice %9 {offsets = [0, 0], sizes = [10, 8], strides = [1, 1]} : vector<22x16xf32> to vector<10x8xf32>
    %13 = vector.extract_strided_slice %9 {offsets = [0, 8], sizes = [10, 8], strides = [1, 1]} : vector<22x16xf32> to vector<10x8xf32>
    %14 = vector.extract_strided_slice %9 {offsets = [10, 0], sizes = [8, 8], strides = [1, 1]} : vector<22x16xf32> to vector<8x8xf32>
    %15 = vector.extract_strided_slice %9 {offsets = [10, 8], sizes = [8, 8], strides = [1, 1]} : vector<22x16xf32> to vector<8x8xf32>
    %16 = vector.extract_strided_slice %9 {offsets = [18, 0], sizes = [1, 8], strides = [1, 1]} : vector<22x16xf32> to vector<1x8xf32>
    %17 = vector.extract_strided_slice %9 {offsets = [18, 8], sizes = [1, 8], strides = [1, 1]} : vector<22x16xf32> to vector<1x8xf32>
    %18 = vector.extract_strided_slice %9 {offsets = [19, 0], sizes = [1, 8], strides = [1, 1]} : vector<22x16xf32> to vector<1x8xf32>
    %19 = vector.extract_strided_slice %9 {offsets = [19, 8], sizes = [1, 8], strides = [1, 1]} : vector<22x16xf32> to vector<1x8xf32>
    %20 = vector.extract_strided_slice %9 {offsets = [20, 0], sizes = [1, 10], strides = [1, 1]} : vector<22x16xf32> to vector<1x10xf32>
    %21 = vector.extract_strided_slice %9 {offsets = [21, 0], sizes = [1, 10], strides = [1, 1]} : vector<22x16xf32> to vector<1x10xf32>
    %22 = vector.extract_strided_slice %10 {offsets = [0, 0], sizes = [32, 128], strides = [1, 1]} : vector<32x216xf32> to vector<32x128xf32>
    %23 = vector.extract_strided_slice %10 {offsets = [0, 128], sizes = [32, 16], strides = [1, 1]} : vector<32x216xf32> to vector<32x16xf32>
    %24 = vector.extract_strided_slice %10 {offsets = [0, 144], sizes = [32, 64], strides = [1, 1]} : vector<32x216xf32> to vector<32x64xf32>
    %25 = vector.extract_strided_slice %10 {offsets = [0, 208], sizes = [32, 8], strides = [1, 1]} : vector<32x216xf32> to vector<32x8xf32>
    %26 = vector.extract_strided_slice %11 {offsets = [0, 0], sizes = [128, 16], strides = [1, 1]} : vector<128x24xf32> to vector<128x16xf32>
    %27 = vector.extract_strided_slice %11 {offsets = [0, 16], sizes = [64, 8], strides = [1, 1]} : vector<128x24xf32> to vector<64x8xf32>
    %cst = arith.constant dense<0.000000e+00> : vector<64x2xf32>
    %28 = tpu.matmul %5, %1, %cst {dimension_numbers = #tpu.dot_dimension_numbers<[1], [0], [0], [1], [0, 0, 1, 1], [], []>} : vector<64x32xf32>, vector<32x2xf32>, vector<64x2xf32> -> vector<64x2xf32>
    %29 = vector.extract_strided_slice %7 {offsets = [0, 0], sizes = [2, 236], strides = [1, 1]} : vector<6x236xf32> to vector<2x236xf32>
    %cst_13 = arith.constant dense<0.000000e+00> : vector<32x236xf32>
    %30 = tpu.matmul %1, %29, %cst_13 {dimension_numbers = #tpu.dot_dimension_numbers<[1], [0], [0], [1], [0, 0, 1, 1], [], []>} : vector<32x2xf32>, vector<2x236xf32>, vector<32x236xf32> -> vector<32x236xf32>
    %31 = vector.extract_strided_slice %28 {offsets = [0, 0], sizes = [32, 2], strides = [1, 1]} : vector<64x2xf32> to vector<32x2xf32>
    %32 = vector.extract_strided_slice %7 {offsets = [2, 0], sizes = [2, 236], strides = [1, 1]} : vector<6x236xf32> to vector<2x236xf32>
    %cst_14 = arith.constant dense<0.000000e+00> : vector<32x236xf32>
    %33 = tpu.matmul %31, %32, %cst_14 {dimension_numbers = #tpu.dot_dimension_numbers<[1], [0], [0], [1], [0, 0, 1, 1], [], []>} : vector<32x2xf32>, vector<2x236xf32>, vector<32x236xf32> -> vector<32x236xf32>
    %34 = arith.addf %30, %33 : vector<32x236xf32>
    %35 = vector.extract_strided_slice %28 {offsets = [32, 0], sizes = [32, 2], strides = [1, 1]} : vector<64x2xf32> to vector<32x2xf32>
    %36 = vector.extract_strided_slice %7 {offsets = [4, 0], sizes = [2, 236], strides = [1, 1]} : vector<6x236xf32> to vector<2x236xf32>
    %cst_15 = arith.constant dense<0.000000e+00> : vector<32x236xf32>
    %37 = tpu.matmul %35, %36, %cst_15 {dimension_numbers = #tpu.dot_dimension_numbers<[1], [0], [0], [1], [0, 0, 1, 1], [], []>} : vector<32x2xf32>, vector<2x236xf32>, vector<32x236xf32> -> vector<32x236xf32>
    %38 = arith.addf %34, %37 : vector<32x236xf32>
    %39 = vector.extract_strided_slice %8 {offsets = [0, 0], sizes = [24, 154], strides = [1, 1]} : vector<24x236xf32> to vector<24x154xf32>
    %40 = vector.extract_strided_slice %38 {offsets = [0, 0], sizes = [32, 128], strides = [1, 1]} : vector<32x236xf32> to vector<32x128xf32>
    %41 = vector.extract_strided_slice %38 {offsets = [0, 128], sizes = [32, 10], strides = [1, 1]} : vector<32x236xf32> to vector<32x10xf32>
    %42 = vector.extract_strided_slice %38 {offsets = [0, 138], sizes = [32, 16], strides = [1, 1]} : vector<32x236xf32> to vector<32x16xf32>
    %cst_16 = arith.constant dense<0.000000e+00> : vector<64x8xf32>
    %43 = tpu.matmul %5, %2, %cst_16 {dimension_numbers = #tpu.dot_dimension_numbers<[1], [0], [0], [1], [0, 0, 1, 1], [], []>} : vector<64x32xf32>, vector<32x8xf32>, vector<64x8xf32> -> vector<64x8xf32>
    %44 = vector.extract_strided_slice %39 {offsets = [0, 0], sizes = [8, 154], strides = [1, 1]} : vector<24x154xf32> to vector<8x154xf32>
    %cst_17 = arith.constant dense<0.000000e+00> : vector<32x154xf32>
    %45 = tpu.matmul %2, %44, %cst_17 {dimension_numbers = #tpu.dot_dimension_numbers<[1], [0], [0], [1], [0, 0, 1, 1], [], []>} : vector<32x8xf32>, vector<8x154xf32>, vector<32x154xf32> -> vector<32x154xf32>
    %46 = vector.extract_strided_slice %43 {offsets = [0, 0], sizes = [32, 8], strides = [1, 1]} : vector<64x8xf32> to vector<32x8xf32>
    %47 = vector.extract_strided_slice %39 {offsets = [8, 0], sizes = [8, 154], strides = [1, 1]} : vector<24x154xf32> to vector<8x154xf32>
    %cst_18 = arith.constant dense<0.000000e+00> : vector<32x154xf32>
    %48 = tpu.matmul %46, %47, %cst_18 {dimension_numbers = #tpu.dot_dimension_numbers<[1], [0], [0], [1], [0, 0, 1, 1], [], []>} : vector<32x8xf32>, vector<8x154xf32>, vector<32x154xf32> -> vector<32x154xf32>
    %49 = arith.addf %45, %48 : vector<32x154xf32>
    %50 = vector.extract_strided_slice %43 {offsets = [32, 0], sizes = [32, 8], strides = [1, 1]} : vector<64x8xf32> to vector<32x8xf32>
    %51 = vector.extract_strided_slice %39 {offsets = [16, 0], sizes = [8, 154], strides = [1, 1]} : vector<24x154xf32> to vector<8x154xf32>
    %cst_19 = arith.constant dense<0.000000e+00> : vector<32x154xf32>
    %52 = tpu.matmul %50, %51, %cst_19 {dimension_numbers = #tpu.dot_dimension_numbers<[1], [0], [0], [1], [0, 0, 1, 1], [], []>} : vector<32x8xf32>, vector<8x154xf32>, vector<32x154xf32> -> vector<32x154xf32>
    %53 = arith.addf %49, %52 : vector<32x154xf32>
    %54 = vector.extract_strided_slice %53 {offsets = [0, 0], sizes = [32, 128], strides = [1, 1]} : vector<32x154xf32> to vector<32x128xf32>
    %55 = vector.extract_strided_slice %53 {offsets = [0, 128], sizes = [32, 10], strides = [1, 1]} : vector<32x154xf32> to vector<32x10xf32>
    %56 = vector.extract_strided_slice %53 {offsets = [0, 138], sizes = [32, 16], strides = [1, 1]} : vector<32x154xf32> to vector<32x16xf32>
    %57 = arith.addf %41, %55 : vector<32x10xf32>
    %58 = vector.broadcast %20 : vector<1x10xf32> to vector<32x10xf32>
    %59 = arith.addf %57, %58 : vector<32x10xf32>
    %60 = arith.negf %59 : vector<32x10xf32>
    %61 = math.exp %60 : vector<32x10xf32>
    %cst_20 = arith.constant 1.000000e+00 : f32
    %62 = vector.broadcast %cst_20 : f32 to vector<32x10xf32>
    %63 = arith.addf %62, %61 : vector<32x10xf32>
    %64 = arith.divf %62, %63 : vector<32x10xf32>
    %cst_21 = arith.constant dense<0.000000e+00> : vector<32x8xf32>
    %65 = tpu.matmul %64, %12, %cst_21 {dimension_numbers = #tpu.dot_dimension_numbers<[1], [0], [0], [1], [0, 0, 1, 1], [], []>} : vector<32x10xf32>, vector<10x8xf32>, vector<32x8xf32> -> vector<32x8xf32>
    %66 = vector.broadcast %16 : vector<1x8xf32> to vector<32x8xf32>
    %67 = arith.addf %65, %66 : vector<32x8xf32>
    %68 = arith.negf %67 : vector<32x8xf32>
    %69 = math.exp %68 : vector<32x8xf32>
    %cst_22 = arith.constant 1.000000e+00 : f32
    %70 = vector.broadcast %cst_22 : f32 to vector<32x8xf32>
    %71 = arith.addf %70, %69 : vector<32x8xf32>
    %72 = arith.divf %70, %71 : vector<32x8xf32>
    %cst_23 = arith.constant dense<0.000000e+00> : vector<32x8xf32>
    %73 = tpu.matmul %72, %14, %cst_23 {dimension_numbers = #tpu.dot_dimension_numbers<[1], [0], [0], [1], [0, 0, 1, 1], [], []>} : vector<32x8xf32>, vector<8x8xf32>, vector<32x8xf32> -> vector<32x8xf32>
    %74 = vector.broadcast %18 : vector<1x8xf32> to vector<32x8xf32>
    %75 = arith.addf %73, %74 : vector<32x8xf32>
    %cst_24 = arith.constant 3.000000e+00 : f32
    %76 = vector.broadcast %cst_24 : f32 to vector<32x8xf32>
    %77 = arith.mulf %76, %3 : vector<32x8xf32>
    %78 = arith.mulf %77, %75 : vector<32x8xf32>
    %79 = math.tanh %78 : vector<32x8xf32>
    %cst_25 = arith.constant dense<0.000000e+00> : vector<32x32xf32>
    %80 = tpu.matmul %79, %79, %cst_25 {dimension_numbers = #tpu.dot_dimension_numbers<[1], [1], [0], [0], [0, 0, 1, 0], [], []>} : vector<32x8xf32>, vector<32x8xf32>, vector<32x32xf32> -> vector<32x32xf32>
    %cst_26 = arith.constant 3.000000e+00 : f32
    %81 = vector.broadcast %cst_26 : f32 to vector<32x32xf32>
    %82 = arith.mulf %81, %80 : vector<32x32xf32>
    %83 = math.tanh %82 : vector<32x32xf32>
    %cst_27 = arith.constant 0.000000e+00 : f32
    %84 = vector.broadcast %cst_27 : f32 to vector<32x32xf32>
    %85 = arith.maximumf %83, %84 : vector<32x32xf32>
    %86 = arith.mulf %6, %85 : vector<32x32xf32>
    %87 = arith.addf %40, %54 : vector<32x128xf32>
    %88 = arith.mulf %22, %87 : vector<32x128xf32>
    %cst_28 = arith.constant dense<0.000000e+00> : vector<32x16xf32>
    %89 = tpu.matmul %88, %26, %cst_28 {dimension_numbers = #tpu.dot_dimension_numbers<[1], [0], [0], [1], [0, 0, 1, 1], [], []>} : vector<32x128xf32>, vector<128x16xf32>, vector<32x16xf32> -> vector<32x16xf32>
    %90 = arith.addf %23, %89 : vector<32x16xf32>
    %91 = arith.addf %42, %56 : vector<32x16xf32>
    %cst_29 = arith.constant dense<0.000000e+00> : vector<32x16xf32>
    %92 = tpu.matmul %86, %91, %cst_29 {dimension_numbers = #tpu.dot_dimension_numbers<[1], [0], [0], [1], [0, 0, 1, 1], [], []>} : vector<32x32xf32>, vector<32x16xf32>, vector<32x16xf32> -> vector<32x16xf32>
    %93 = arith.addf %90, %92 : vector<32x16xf32>
    %94 = arith.negf %93 : vector<32x16xf32>
    %95 = math.exp %94 : vector<32x16xf32>
    %cst_30 = arith.constant 1.000000e+00 : f32
    %96 = vector.broadcast %cst_30 : f32 to vector<32x16xf32>
    %97 = arith.addf %96, %95 : vector<32x16xf32>
    %98 = arith.divf %96, %97 : vector<32x16xf32>
    %99 = vector.extract_strided_slice %98 {offsets = [0, 0], sizes = [32, 8], strides = [1, 1]} : vector<32x16xf32> to vector<32x8xf32>
    %100 = vector.extract_strided_slice %98 {offsets = [0, 8], sizes = [32, 8], strides = [1, 1]} : vector<32x16xf32> to vector<32x8xf32>
    %101 = arith.mulf %99, %2 : vector<32x8xf32>
    %102 = vector.extract_strided_slice %8 {offsets = [0, 154], sizes = [24, 82], strides = [1, 1]} : vector<24x236xf32> to vector<24x82xf32>
    %103 = vector.extract_strided_slice %38 {offsets = [0, 154], sizes = [32, 64], strides = [1, 1]} : vector<32x236xf32> to vector<32x64xf32>
    %104 = vector.extract_strided_slice %38 {offsets = [0, 218], sizes = [32, 10], strides = [1, 1]} : vector<32x236xf32> to vector<32x10xf32>
    %105 = vector.extract_strided_slice %38 {offsets = [0, 228], sizes = [32, 8], strides = [1, 1]} : vector<32x236xf32> to vector<32x8xf32>
    %cst_31 = arith.constant dense<0.000000e+00> : vector<64x8xf32>
    %106 = tpu.matmul %5, %101, %cst_31 {dimension_numbers = #tpu.dot_dimension_numbers<[1], [0], [0], [1], [0, 0, 1, 1], [], []>} : vector<64x32xf32>, vector<32x8xf32>, vector<64x8xf32> -> vector<64x8xf32>
    %107 = vector.extract_strided_slice %102 {offsets = [0, 0], sizes = [8, 82], strides = [1, 1]} : vector<24x82xf32> to vector<8x82xf32>
    %cst_32 = arith.constant dense<0.000000e+00> : vector<32x82xf32>
    %108 = tpu.matmul %101, %107, %cst_32 {dimension_numbers = #tpu.dot_dimension_numbers<[1], [0], [0], [1], [0, 0, 1, 1], [], []>} : vector<32x8xf32>, vector<8x82xf32>, vector<32x82xf32> -> vector<32x82xf32>
    %109 = vector.extract_strided_slice %106 {offsets = [0, 0], sizes = [32, 8], strides = [1, 1]} : vector<64x8xf32> to vector<32x8xf32>
    %110 = vector.extract_strided_slice %102 {offsets = [8, 0], sizes = [8, 82], strides = [1, 1]} : vector<24x82xf32> to vector<8x82xf32>
    %cst_33 = arith.constant dense<0.000000e+00> : vector<32x82xf32>
    %111 = tpu.matmul %109, %110, %cst_33 {dimension_numbers = #tpu.dot_dimension_numbers<[1], [0], [0], [1], [0, 0, 1, 1], [], []>} : vector<32x8xf32>, vector<8x82xf32>, vector<32x82xf32> -> vector<32x82xf32>
    %112 = arith.addf %108, %111 : vector<32x82xf32>
    %113 = vector.extract_strided_slice %106 {offsets = [32, 0], sizes = [32, 8], strides = [1, 1]} : vector<64x8xf32> to vector<32x8xf32>
    %114 = vector.extract_strided_slice %102 {offsets = [16, 0], sizes = [8, 82], strides = [1, 1]} : vector<24x82xf32> to vector<8x82xf32>
    %cst_34 = arith.constant dense<0.000000e+00> : vector<32x82xf32>
    %115 = tpu.matmul %113, %114, %cst_34 {dimension_numbers = #tpu.dot_dimension_numbers<[1], [0], [0], [1], [0, 0, 1, 1], [], []>} : vector<32x8xf32>, vector<8x82xf32>, vector<32x82xf32> -> vector<32x82xf32>
    %116 = arith.addf %112, %115 : vector<32x82xf32>
    %117 = vector.extract_strided_slice %116 {offsets = [0, 0], sizes = [32, 64], strides = [1, 1]} : vector<32x82xf32> to vector<32x64xf32>
    %118 = vector.extract_strided_slice %116 {offsets = [0, 64], sizes = [32, 10], strides = [1, 1]} : vector<32x82xf32> to vector<32x10xf32>
    %119 = vector.extract_strided_slice %116 {offsets = [0, 74], sizes = [32, 8], strides = [1, 1]} : vector<32x82xf32> to vector<32x8xf32>
    %120 = arith.addf %104, %118 : vector<32x10xf32>
    %121 = vector.broadcast %21 : vector<1x10xf32> to vector<32x10xf32>
    %122 = arith.addf %120, %121 : vector<32x10xf32>
    %123 = arith.negf %122 : vector<32x10xf32>
    %124 = math.exp %123 : vector<32x10xf32>
    %cst_35 = arith.constant 1.000000e+00 : f32
    %125 = vector.broadcast %cst_35 : f32 to vector<32x10xf32>
    %126 = arith.addf %125, %124 : vector<32x10xf32>
    %127 = arith.divf %125, %126 : vector<32x10xf32>
    %cst_36 = arith.constant dense<0.000000e+00> : vector<32x8xf32>
    %128 = tpu.matmul %127, %13, %cst_36 {dimension_numbers = #tpu.dot_dimension_numbers<[1], [0], [0], [1], [0, 0, 1, 1], [], []>} : vector<32x10xf32>, vector<10x8xf32>, vector<32x8xf32> -> vector<32x8xf32>
    %129 = vector.broadcast %17 : vector<1x8xf32> to vector<32x8xf32>
    %130 = arith.addf %128, %129 : vector<32x8xf32>
    %131 = arith.negf %130 : vector<32x8xf32>
    %132 = math.exp %131 : vector<32x8xf32>
    %cst_37 = arith.constant 1.000000e+00 : f32
    %133 = vector.broadcast %cst_37 : f32 to vector<32x8xf32>
    %134 = arith.addf %133, %132 : vector<32x8xf32>
    %135 = arith.divf %133, %134 : vector<32x8xf32>
    %cst_38 = arith.constant dense<0.000000e+00> : vector<32x8xf32>
    %136 = tpu.matmul %135, %15, %cst_38 {dimension_numbers = #tpu.dot_dimension_numbers<[1], [0], [0], [1], [0, 0, 1, 1], [], []>} : vector<32x8xf32>, vector<8x8xf32>, vector<32x8xf32> -> vector<32x8xf32>
    %137 = vector.broadcast %19 : vector<1x8xf32> to vector<32x8xf32>
    %138 = arith.addf %136, %137 : vector<32x8xf32>
    %cst_39 = arith.constant 3.000000e+00 : f32
    %139 = vector.broadcast %cst_39 : f32 to vector<32x8xf32>
    %140 = arith.mulf %139, %3 : vector<32x8xf32>
    %141 = arith.mulf %140, %138 : vector<32x8xf32>
    %142 = math.tanh %141 : vector<32x8xf32>
    %cst_40 = arith.constant dense<0.000000e+00> : vector<32x32xf32>
    %143 = tpu.matmul %142, %142, %cst_40 {dimension_numbers = #tpu.dot_dimension_numbers<[1], [1], [0], [0], [0, 0, 1, 0], [], []>} : vector<32x8xf32>, vector<32x8xf32>, vector<32x32xf32> -> vector<32x32xf32>
    %cst_41 = arith.constant 3.000000e+00 : f32
    %144 = vector.broadcast %cst_41 : f32 to vector<32x32xf32>
    %145 = arith.mulf %144, %143 : vector<32x32xf32>
    %146 = math.tanh %145 : vector<32x32xf32>
    %cst_42 = arith.constant 0.000000e+00 : f32
    %147 = vector.broadcast %cst_42 : f32 to vector<32x32xf32>
    %148 = arith.maximumf %146, %147 : vector<32x32xf32>
    %149 = arith.mulf %6, %148 : vector<32x32xf32>
    %150 = arith.addf %103, %117 : vector<32x64xf32>
    %151 = arith.mulf %24, %150 : vector<32x64xf32>
    %cst_43 = arith.constant dense<0.000000e+00> : vector<32x8xf32>
    %152 = tpu.matmul %151, %27, %cst_43 {dimension_numbers = #tpu.dot_dimension_numbers<[1], [0], [0], [1], [0, 0, 1, 1], [], []>} : vector<32x64xf32>, vector<64x8xf32>, vector<32x8xf32> -> vector<32x8xf32>
    %153 = arith.addf %25, %152 : vector<32x8xf32>
    %154 = arith.addf %105, %119 : vector<32x8xf32>
    %cst_44 = arith.constant dense<0.000000e+00> : vector<32x8xf32>
    %155 = tpu.matmul %149, %154, %cst_44 {dimension_numbers = #tpu.dot_dimension_numbers<[1], [0], [0], [1], [0, 0, 1, 1], [], []>} : vector<32x32xf32>, vector<32x8xf32>, vector<32x8xf32> -> vector<32x8xf32>
    %156 = arith.addf %153, %155 : vector<32x8xf32>
    %157 = math.tanh %156 : vector<32x8xf32>
    %158 = arith.mulf %100, %2 : vector<32x8xf32>
    %cst_45 = arith.constant 1.000000e+00 : f32
    %159 = vector.broadcast %cst_45 : f32 to vector<32x8xf32>
    %160 = arith.subf %159, %100 : vector<32x8xf32>
    %161 = arith.mulf %160, %157 : vector<32x8xf32>
    %162 = arith.addf %158, %161 : vector<32x8xf32>
    %c0_46 = arith.constant 0 : index
    %c0_47 = arith.constant 0 : index
    %163 = vector.load %arg8[%c0_46, %c0_47] : memref<32x8xf32, #tpu.memory_space<vmem>>, vector<32x8xf32>
    tpu.vector_store %arg8[%c0_46, %c0_47], %162 {strides = array<i32>} : memref<32x8xf32, #tpu.memory_space<vmem>>, vector<32x8xf32>,
    return
  }
  func.func @transform_0(%arg0: i32) -> (i32, i32) {
    %c0_i32 = arith.constant 0 : i32
    %c0_i32_0 = arith.constant 0 : i32
    return %arg0, %c0_i32 : i32, i32
  }
  func.func @transform_1(%arg0: i32) -> (i32, i32) {
    %c0_i32 = arith.constant 0 : i32
    %c0_i32_0 = arith.constant 0 : i32
    %c0_i32_1 = arith.constant 0 : i32
    return %c0_i32, %c0_i32_0 : i32, i32
  }
  func.func @transform_2(%arg0: i32) -> (i32, i32) {
    %c0_i32 = arith.constant 0 : i32
    %c0_i32_0 = arith.constant 0 : i32
    %c0_i32_1 = arith.constant 0 : i32
    return %c0_i32, %c0_i32_0 : i32, i32
  }
  func.func @transform_3(%arg0: i32) -> (i32, i32) {
    %c0_i32 = arith.constant 0 : i32
    %c0_i32_0 = arith.constant 0 : i32
    %c0_i32_1 = arith.constant 0 : i32
    return %c0_i32, %c0_i32_0 : i32, i32
  }
  func.func @transform_4(%arg0: i32) -> (i32, i32) {
    %c0_i32 = arith.constant 0 : i32
    %c0_i32_0 = arith.constant 0 : i32
    %c0_i32_1 = arith.constant 0 : i32
    return %c0_i32, %c0_i32_0 : i32, i32
  }
  func.func @transform_5(%arg0: i32) -> (i32, i32) {
    %c0_i32 = arith.constant 0 : i32
    %c0_i32_0 = arith.constant 0 : i32
    %c0_i32_1 = arith.constant 0 : i32
    return %c0_i32, %c0_i32_0 : i32, i32
  }
  func.func @transform_6(%arg0: i32) -> (i32, i32) {
    %c0_i32 = arith.constant 0 : i32
    %c0_i32_0 = arith.constant 0 : i32
    %c0_i32_1 = arith.constant 0 : i32
    return %c0_i32, %c0_i32_0 : i32, i32
  }
  func.func @transform_7(%arg0: i32) -> (i32, i32) {
    %c0_i32 = arith.constant 0 : i32
    %c0_i32_0 = arith.constant 0 : i32
    return %arg0, %c0_i32 : i32, i32
  }
}

</mosaic_0001>

<llo_original>
// kernel: agcrn_cell_forward.1
$region0: #{agcrn_cell_forward.1}
  #allocation0 [shape = 'u32[]', space=smem, size = 0x4, offset = 0x4, fixed_abs, tag = 'smem constant byte address 0x4 - core index']
  #allocation1 [shape = 'u32[72,128]{1,0:T(1,128)}', space=vmem, size = 0x9000, scoped, tag = 'internal scratch']
  %s0 = inlined_call_operand.vmem [shape: f32[32,18], index: 0, kind: input, shape index: {}]
  %s1 = inlined_call_operand.vmem [shape: f32[96,32], index: 1, kind: input, shape index: {}]
  %s2 = inlined_call_operand.vmem [shape: f32[6,236], index: 2, kind: input, shape index: {}]
  %s3 = inlined_call_operand.vmem [shape: f32[24,236], index: 3, kind: input, shape index: {}]
  %s4 = inlined_call_operand.vmem [shape: f32[22,16], index: 4, kind: input, shape index: {}]
  %s5 = inlined_call_operand.vmem [shape: f32[32,216], index: 5, kind: input, shape index: {}]
  %s6 = inlined_call_operand.vmem [shape: f32[128,24], index: 6, kind: input, shape index: {}]
  %s7 = inlined_call_operand.vmem [shape: f32[32,8], index: 7, kind: output, shape index: {}]
  %s8 = sld [smem:[#allocation0]]
  $region38: #{agcrn_cell_forward.1} parent=0
    _
  %s10 = ssub.s32 1, %s8
  %s11 = scalar_select 0, %s10, %s8
  // Predicated region
  $region2: #{agcrn_cell_forward.1} parent=0 // pred_check
    _
  $region3: #{agcrn_cell_forward.1} parent=0 // pred_check_branch
    %13 = sbr.rel (0) target = $region5
  $region4: #{agcrn_cell_forward.1} parent=0 // pred_region
    _
  $region5: #{agcrn_cell_forward.1} parent=0 // pred_fallthru
    _
  // Predicated region
  $region6: #{agcrn_cell_forward.1} parent=0 // pred_check
    _
  $region7: #{agcrn_cell_forward.1} parent=0 // pred_check_branch
    %15 = sbr.rel (0) target = $region9
  $region8: #{agcrn_cell_forward.1} parent=0 // pred_region
    _
  $region9: #{agcrn_cell_forward.1} parent=0 // pred_fallthru
    _
  // Predicated region
  $region10: #{agcrn_cell_forward.1} parent=0 // pred_check
    _
  $region11: #{agcrn_cell_forward.1} parent=0 // pred_check_branch
    %17 = sbr.rel (0) target = $region13
  $region12: #{agcrn_cell_forward.1} parent=0 // pred_region
    _
  $region13: #{agcrn_cell_forward.1} parent=0 // pred_fallthru
    _
  // Predicated region
  $region14: #{agcrn_cell_forward.1} parent=0 // pred_check
    _
  $region15: #{agcrn_cell_forward.1} parent=0 // pred_check_branch
    %19 = sbr.rel (0) target = $region17
  $region16: #{agcrn_cell_forward.1} parent=0 // pred_region
    _
  $region17: #{agcrn_cell_forward.1} parent=0 // pred_fallthru
    _
  // Predicated region
  $region18: #{agcrn_cell_forward.1} parent=0 // pred_check
    _
  $region19: #{agcrn_cell_forward.1} parent=0 // pred_check_branch
    %21 = sbr.rel (0) target = $region21
  $region20: #{agcrn_cell_forward.1} parent=0 // pred_region
    _
  $region21: #{agcrn_cell_forward.1} parent=0 // pred_fallthru
    _
  // Predicated region
  $region22: #{agcrn_cell_forward.1} parent=0 // pred_check
    _
  $region23: #{agcrn_cell_forward.1} parent=0 // pred_check_branch
    %23 = sbr.rel (0) target = $region25
  $region24: #{agcrn_cell_forward.1} parent=0 // pred_region
    _
  $region25: #{agcrn_cell_forward.1} parent=0 // pred_fallthru
    _
  // Predicated region
  $region26: #{agcrn_cell_forward.1} parent=0 // pred_check
    _
  $region27: #{agcrn_cell_forward.1} parent=0 // pred_check_branch
    %25 = sbr.rel (0) target = $region29
  $region28: #{agcrn_cell_forward.1} parent=0 // pred_region
    _
  $region29: #{agcrn_cell_forward.1} parent=0 // pred_fallthru
    _
  %v26 = vld [vmem:[%s0] sm:$0xff]
  %v27 = vld [vmem:[%s0 + $0x8] sm:$0xff]
  %v28 = vld [vmem:[%s0 + $0x10] sm:$0xff]
  %v29 = vld [vmem:[%s0 + $0x18] sm:$0xff]
  %v30 = vld [vmem:[%s1] sm:$0xff]
  %v31 = vld [vmem:[%s1 + $0x8] sm:$0xff]
  %v32 = vld [vmem:[%s1 + $0x10] sm:$0xff]
  %v33 = vld [vmem:[%s1 + $0x18] sm:$0xff]
  %v34 = vld [vmem:[%s1 + $0x20] sm:$0xff]
  %v35 = vld [vmem:[%s1 + $0x28] sm:$0xff]
  %v36 = vld [vmem:[%s1 + $0x30] sm:$0xff]
  %v37 = vld [vmem:[%s1 + $0x38] sm:$0xff]
  %v38 = vld [vmem:[%s1 + $0x40] sm:$0xff]
  %v39 = vld [vmem:[%s1 + $0x48] sm:$0xff]
  %v40 = vld [vmem:[%s1 + $0x50] sm:$0xff]
  %v41 = vld [vmem:[%s1 + $0x58] sm:$0xff]
  %v42 = vld [vmem:[%s2] sm:$0x3f]
  %v43 = vld [vmem:[%s2 + $0x8] sm:$0x3f]
  %v44 = vld [vmem:[%s3] sm:$0xff]
  %v45 = vld [vmem:[%s3 + $0x8] sm:$0xff]
  %v46 = vld [vmem:[%s3 + $0x10] sm:$0xff]
  %v47 = vld [vmem:[%s3 + $0x18] sm:$0xff]
  %v48 = vld [vmem:[%s3 + $0x20] sm:$0xff]
  %v49 = vld [vmem:[%s3 + $0x28] sm:$0xff]
  %v50 = vld [vmem:[%s4] sm:$0xff]
  %v51 = vld [vmem:[%s4 + $0x8] sm:$0xff]
  %v52 = vld [vmem:[%s4 + $0x10] sm:$0x3f]
  %v53 = vld [vmem:[%s5] sm:$0xff]
  %v54 = vld [vmem:[%s5 + $0x8] sm:$0xff]
  %v55 = vld [vmem:[%s5 + $0x10] sm:$0xff]
  %v56 = vld [vmem:[%s5 + $0x18] sm:$0xff]
  %v57 = vld [vmem:[%s5 + $0x20] sm:$0xff]
  %v58 = vld [vmem:[%s5 + $0x28] sm:$0xff]
  %v59 = vld [vmem:[%s5 + $0x30] sm:$0xff]
  %v60 = vld [vmem:[%s5 + $0x38] sm:$0xff]
  %v61 = vld [vmem:[%s6] sm:$0xff]
  %v62 = vld [vmem:[%s6 + $0x8] sm:$0xff]
  %v63 = vld [vmem:[%s6 + $0x10] sm:$0xff]
  %v64 = vld [vmem:[%s6 + $0x18] sm:$0xff]
  %v65 = vld [vmem:[%s6 + $0x20] sm:$0xff]
  %v66 = vld [vmem:[%s6 + $0x28] sm:$0xff]
  %v67 = vld [vmem:[%s6 + $0x30] sm:$0xff]
  %v68 = vld [vmem:[%s6 + $0x38] sm:$0xff]
  %v69 = vld [vmem:[%s6 + $0x40] sm:$0xff]
  %v70 = vld [vmem:[%s6 + $0x48] sm:$0xff]
  %v71 = vld [vmem:[%s6 + $0x50] sm:$0xff]
  %v72 = vld [vmem:[%s6 + $0x58] sm:$0xff]
  %v73 = vld [vmem:[%s6 + $0x60] sm:$0xff]
  %v74 = vld [vmem:[%s6 + $0x68] sm:$0xff]
  %v75 = vld [vmem:[%s6 + $0x70] sm:$0xff]
  %v76 = vld [vmem:[%s6 + $0x78] sm:$0xff]
  %vm77 = vcmask 261120
  %v79 = vsel %vm77, %v30, 0
  %v82 = vsel %vm77, %v31, 0
  %v85 = vsel %vm77, %v32, 0
  %v88 = vsel %vm77, %v33, 0
  %v91 = vsel %vm77, %v34, 0
  %v94 = vsel %vm77, %v35, 0
  %v97 = vsel %vm77, %v36, 0
  %v100 = vsel %vm77, %v37, 0
  %102 = vmatpush.msra.mxu0 0.0
  %103 = vmatpush.msra.mxu0 0.0
  %104 = vmatpush.msra.mxu0 0.0
  %105 = vmatpush.msra.mxu0 0.0
  %106 = vmatpush.msra.mxu0 0.0
  %107 = vmatpush.msra.mxu0 0.0
  %108 = vmatpush.msra.mxu0 0.0
  %109 = vmatpush.msra.mxu0 0.0
  %110 = vmatpush.msra.mxu0 0.0
  %111 = vmatpush.msra.mxu0 0.0
  %112 = vmatpush.msra.mxu0 0.0
  %113 = vmatpush.msra.mxu0 0.0
  %114 = vmatpush.msra.mxu0 %v29
  %115 = vmatpush.msra.mxu0 %v28
  %116 = vmatpush.msra.mxu0 %v27
  %117 = vmatpush.msra.mxu0 %v26
  %118 = vmatmul.f32.gmra.mxu0 %v79
  %v119 = vpop.f32.mrf.mxu0
  %v120 = vadd.f32 0.0, %v119
  %121 = vmatmul.f32.gmra.mxu0 %v82
  %v122 = vpop.f32.mrf.mxu0
  %v123 = vadd.f32 0.0, %v122
  %124 = vmatmul.f32.gmra.mxu0 %v85
  %v125 = vpop.f32.mrf.mxu0
  %v126 = vadd.f32 0.0, %v125
  %127 = vmatmul.f32.gmra.mxu0 %v88
  %v128 = vpop.f32.mrf.mxu0
  %v129 = vadd.f32 0.0, %v128
  %130 = vmatmul.f32.gmra.mxu0 %v91
  %v131 = vpop.f32.mrf.mxu0
  %v132 = vadd.f32 0.0, %v131
  %133 = vmatmul.f32.gmra.mxu0 %v94
  %v134 = vpop.f32.mrf.mxu0
  %v135 = vadd.f32 0.0, %v134
  %136 = vmatmul.f32.gmra.mxu0 %v97
  %v137 = vpop.f32.mrf.mxu0
  %v138 = vadd.f32 0.0, %v137
  %139 = vmatmul.f32.gmra.mxu0 %v100
  %v140 = vpop.f32.mrf.mxu0
  %v141 = vadd.f32 0.0, %v140
  %142 = vdwg.mxu0
  %v145 = vrot.slane %v42, 2
  %v146 = vrot.slane %v43, 2
  %vm147 = vcmask 15360
  %v149 = vsel %vm147, %v120, 0
  %v152 = vsel %vm147, %v123, 0
  %v155 = vsel %vm147, %v126, 0
  %v158 = vsel %vm147, %v129, 0
  %vm160 = vcmask 1041408
  %v161 = vsel %vm160, %v145, 0
  %v163 = vsel %vm160, %v146, 0
  %165 = vmatpush.msra.mxu0 0.0
  %166 = vmatpush.msra.mxu0 0.0
  %167 = vmatpush.msra.mxu0 0.0
  %168 = vmatpush.msra.mxu0 0.0
  %169 = vmatpush.msra.mxu0 0.0
  %170 = vmatpush.msra.mxu0 0.0
  %171 = vmatpush.msra.mxu0 0.0
  %172 = vmatpush.msra.mxu0 0.0
  %173 = vmatpush.msra.mxu0 0.0
  %174 = vmatpush.msra.mxu0 0.0
  %175 = vmatpush.msra.mxu0 0.0
  %176 = vmatpush.msra.mxu0 0.0
  %177 = vmatpush.msra.mxu0 0.0
  %178 = vmatpush.msra.mxu0 0.0
  %179 = vmatpush.msra.mxu0 0.0
  %180 = vmatpush.msra.mxu0 %v161
  %181 = vmatmul.f32.gmra.mxu0 %v149
  %v182 = vpop.f32.mrf.mxu0
  %v183 = vadd.f32 0.0, %v182
  %184 = vmatmul.f32.gmra.mxu0 %v152
  %v185 = vpop.f32.mrf.mxu0
  %v186 = vadd.f32 0.0, %v185
  %187 = vmatmul.f32.gmra.mxu0 %v155
  %v188 = vpop.f32.mrf.mxu0
  %v189 = vadd.f32 0.0, %v188
  %190 = vmatmul.f32.gmra.mxu0 %v158
  %v191 = vpop.f32.mrf.mxu0
  %v192 = vadd.f32 0.0, %v191
  %193 = vdwg.mxu0
  %194 = vmatpush.msra.mxu0 0.0
  %195 = vmatpush.msra.mxu0 0.0
  %196 = vmatpush.msra.mxu0 0.0
  %197 = vmatpush.msra.mxu0 0.0
  %198 = vmatpush.msra.mxu0 0.0
  %199 = vmatpush.msra.mxu0 0.0
  %200 = vmatpush.msra.mxu0 0.0
  %201 = vmatpush.msra.mxu0 0.0
  %202 = vmatpush.msra.mxu0 0.0
  %203 = vmatpush.msra.mxu0 0.0
  %204 = vmatpush.msra.mxu0 0.0
  %205 = vmatpush.msra.mxu0 0.0
  %206 = vmatpush.msra.mxu0 0.0
  %207 = vmatpush.msra.mxu0 0.0
  %208 = vmatpush.msra.mxu0 0.0
  %209 = vmatpush.msra.mxu0 %v163
  %210 = vmatmul.f32.gmra.mxu0 %v149
  %v211 = vpop.f32.mrf.mxu0
  %v212 = vadd.f32 0.0, %v211
  %213 = vmatmul.f32.gmra.mxu0 %v152
  %v214 = vpop.f32.mrf.mxu0
  %v215 = vadd.f32 0.0, %v214
  %216 = vmatmul.f32.gmra.mxu0 %v155
  %v217 = vpop.f32.mrf.mxu0
  %v218 = vadd.f32 0.0, %v217
  %219 = vmatmul.f32.gmra.mxu0 %v158
  %v220 = vpop.f32.mrf.mxu0
  %v221 = vadd.f32 0.0, %v220
  %222 = vdwg.mxu0
  %v224 = vsel %vm147, %v26, 0
  %v227 = vsel %vm147, %v27, 0
  %v230 = vsel %vm147, %v28, 0
  %v233 = vsel %vm147, %v29, 0
  %v235 = vsel %vm160, %v42, 0
  %v237 = vsel %vm160, %v43, 0
  %239 = vmatpush.msra.mxu0 0.0
  %240 = vmatpush.msra.mxu0 0.0
  %241 = vmatpush.msra.mxu0 0.0
  %242 = vmatpush.msra.mxu0 0.0
  %243 = vmatpush.msra.mxu0 0.0
  %244 = vmatpush.msra.mxu0 0.0
  %245 = vmatpush.msra.mxu0 0.0
  %246 = vmatpush.msra.mxu0 0.0
  %247 = vmatpush.msra.mxu0 0.0
  %248 = vmatpush.msra.mxu0 0.0
  %249 = vmatpush.msra.mxu0 0.0
  %250 = vmatpush.msra.mxu0 0.0
  %251 = vmatpush.msra.mxu0 0.0
  %252 = vmatpush.msra.mxu0 0.0
  %253 = vmatpush.msra.mxu0 0.0
  %254 = vmatpush.msra.mxu0 %v235
  %255 = vmatmul.f32.gmra.mxu0 %v224
  %v256 = vpop.f32.mrf.mxu0
  %v257 = vadd.f32 %v183, %v256
  %258 = vmatmul.f32.gmra.mxu0 %v227
  %v259 = vpop.f32.mrf.mxu0
  %v260 = vadd.f32 %v186, %v259
  %261 = vmatmul.f32.gmra.mxu0 %v230
  %v262 = vpop.f32.mrf.mxu0
  %v263 = vadd.f32 %v189, %v262
  %264 = vmatmul.f32.gmra.mxu0 %v233
  %v265 = vpop.f32.mrf.mxu0
  %v266 = vadd.f32 %v192, %v265
  %267 = vdwg.mxu0
  %268 = vmatpush.msra.mxu0 0.0
  %269 = vmatpush.msra.mxu0 0.0
  %270 = vmatpush.msra.mxu0 0.0
  %271 = vmatpush.msra.mxu0 0.0
  %272 = vmatpush.msra.mxu0 0.0
  %273 = vmatpush.msra.mxu0 0.0
  %274 = vmatpush.msra.mxu0 0.0
  %275 = vmatpush.msra.mxu0 0.0
  %276 = vmatpush.msra.mxu0 0.0
  %277 = vmatpush.msra.mxu0 0.0
  %278 = vmatpush.msra.mxu0 0.0
  %279 = vmatpush.msra.mxu0 0.0
  %280 = vmatpush.msra.mxu0 0.0
  %281 = vmatpush.msra.mxu0 0.0
  %282 = vmatpush.msra.mxu0 0.0
  %283 = vmatpush.msra.mxu0 %v237
  %284 = vmatmul.f32.gmra.mxu0 %v224
  %v285 = vpop.f32.mrf.mxu0
  %v286 = vadd.f32 %v212, %v285
  %287 = vmatmul.f32.gmra.mxu0 %v227
  %v288 = vpop.f32.mrf.mxu0
  %v289 = vadd.f32 %v215, %v288
  %290 = vmatmul.f32.gmra.mxu0 %v230
  %v291 = vpop.f32.mrf.mxu0
  %v292 = vadd.f32 %v218, %v291
  %293 = vmatmul.f32.gmra.mxu0 %v233
  %v294 = vpop.f32.mrf.mxu0
  %v295 = vadd.f32 %v221, %v294
  %296 = vdwg.mxu0
  %v297 = vrot.slane %v42, 4
  %v298 = vrot.slane %v43, 4
  %v300 = vsel %vm147, %v132, 0
  %v303 = vsel %vm147, %v135, 0
  %v306 = vsel %vm147, %v138, 0
  %v309 = vsel %vm147, %v141, 0
  %v311 = vsel %vm160, %v297, 0
  %v313 = vsel %vm160, %v298, 0
  %315 = vmatpush.msra.mxu0 0.0
  %316 = vmatpush.msra.mxu0 0.0
  %317 = vmatpush.msra.mxu0 0.0
  %318 = vmatpush.msra.mxu0 0.0
  %319 = vmatpush.msra.mxu0 0.0
  %320 = vmatpush.msra.mxu0 0.0
  %321 = vmatpush.msra.mxu0 0.0
  %322 = vmatpush.msra.mxu0 0.0
  %323 = vmatpush.msra.mxu0 0.0
  %324 = vmatpush.msra.mxu0 0.0
  %325 = vmatpush.msra.mxu0 0.0
  %326 = vmatpush.msra.mxu0 0.0
  %327 = vmatpush.msra.mxu0 0.0
  %328 = vmatpush.msra.mxu0 0.0
  %329 = vmatpush.msra.mxu0 0.0
  %330 = vmatpush.msra.mxu0 %v311
  %331 = vmatmul.f32.gmra.mxu0 %v300
  %v332 = vpop.f32.mrf.mxu0
  %v333 = vadd.f32 0.0, %v332
  %334 = vmatmul.f32.gmra.mxu0 %v303
  %v335 = vpop.f32.mrf.mxu0
  %v336 = vadd.f32 0.0, %v335
  %337 = vmatmul.f32.gmra.mxu0 %v306
  %v338 = vpop.f32.mrf.mxu0
  %v339 = vadd.f32 0.0, %v338
  %340 = vmatmul.f32.gmra.mxu0 %v309
  %v341 = vpop.f32.mrf.mxu0
  %v342 = vadd.f32 0.0, %v341
  %343 = vdwg.mxu0
  %344 = vmatpush.msra.mxu0 0.0
  %345 = vmatpush.msra.mxu0 0.0
  %346 = vmatpush.msra.mxu0 0.0
  %347 = vmatpush.msra.mxu0 0.0
  %348 = vmatpush.msra.mxu0 0.0
  %349 = vmatpush.msra.mxu0 0.0
  %350 = vmatpush.msra.mxu0 0.0
  %351 = vmatpush.msra.mxu0 0.0
  %352 = vmatpush.msra.mxu0 0.0
  %353 = vmatpush.msra.mxu0 0.0
  %354 = vmatpush.msra.mxu0 0.0
  %355 = vmatpush.msra.mxu0 0.0
  %356 = vmatpush.msra.mxu0 0.0
  %357 = vmatpush.msra.mxu0 0.0
  %358 = vmatpush.msra.mxu0 0.0
  %359 = vmatpush.msra.mxu0 %v313
  %360 = vmatmul.f32.gmra.mxu0 %v300
  %v361 = vpop.f32.mrf.mxu0
  %v362 = vadd.f32 0.0, %v361
  %363 = vmatmul.f32.gmra.mxu0 %v303
  %v364 = vpop.f32.mrf.mxu0
  %v365 = vadd.f32 0.0, %v364
  %366 = vmatmul.f32.gmra.mxu0 %v306
  %v367 = vpop.f32.mrf.mxu0
  %v368 = vadd.f32 0.0, %v367
  %369 = vmatmul.f32.gmra.mxu0 %v309
  %v370 = vpop.f32.mrf.mxu0
  %v371 = vadd.f32 0.0, %v370
  %372 = vdwg.mxu0
  %v373 = vadd.f32 %v257, %v333
  %v374 = vadd.f32 %v286, %v362
  %v375 = vadd.f32 %v260, %v336
  %v376 = vadd.f32 %v289, %v365
  %v377 = vadd.f32 %v263, %v339
  %v378 = vadd.f32 %v292, %v368
  %v379 = vadd.f32 %v266, %v342
  %v380 = vadd.f32 %v295, %v371
  %381 = vrot.lane.b32.xlu0 %v26, 126
  %v382 = vpop.permute.xlu0 %381
  %383 = vrot.lane.b32.xlu0 %v27, 126
  %v384 = vpop.permute.xlu0 %383
  %385 = vrot.lane.b32.xlu0 %v28, 126
  %v386 = vpop.permute.xlu0 %385
  %387 = vrot.lane.b32.xlu0 %v29, 126
  %v388 = vpop.permute.xlu0 %387
  %393 = vmatpush.msra.mxu0 0.0
  %394 = vmatpush.msra.mxu0 0.0
  %395 = vmatpush.msra.mxu0 0.0
  %396 = vmatpush.msra.mxu0 0.0
  %397 = vmatpush.msra.mxu0 0.0
  %398 = vmatpush.msra.mxu0 0.0
  %399 = vmatpush.msra.mxu0 0.0
  %400 = vmatpush.msra.mxu0 0.0
  %401 = vmatpush.msra.mxu0 0.0
  %402 = vmatpush.msra.mxu0 0.0
  %403 = vmatpush.msra.mxu0 0.0
  %404 = vmatpush.msra.mxu0 0.0
  %405 = vmatpush.msra.mxu0 %v388
  %406 = vmatpush.msra.mxu0 %v386
  %407 = vmatpush.msra.mxu0 %v384
  %408 = vmatpush.msra.mxu0 %v382
  %409 = vmatmul.f32.gmra.mxu0 %v79
  %v410 = vpop.f32.mrf.mxu0
  %v411 = vadd.f32 0.0, %v410
  %412 = vmatmul.f32.gmra.mxu0 %v82
  %v413 = vpop.f32.mrf.mxu0
  %v414 = vadd.f32 0.0, %v413
  %415 = vmatmul.f32.gmra.mxu0 %v85
  %v416 = vpop.f32.mrf.mxu0
  %v417 = vadd.f32 0.0, %v416
  %418 = vmatmul.f32.gmra.mxu0 %v88
  %v419 = vpop.f32.mrf.mxu0
  %v420 = vadd.f32 0.0, %v419
  %421 = vmatmul.f32.gmra.mxu0 %v91
  %v422 = vpop.f32.mrf.mxu0
  %v423 = vadd.f32 0.0, %v422
  %424 = vmatmul.f32.gmra.mxu0 %v94
  %v425 = vpop.f32.mrf.mxu0
  %v426 = vadd.f32 0.0, %v425
  %427 = vmatmul.f32.gmra.mxu0 %v97
  %v428 = vpop.f32.mrf.mxu0
  %v429 = vadd.f32 0.0, %v428
  %430 = vmatmul.f32.gmra.mxu0 %v100
  %v431 = vpop.f32.mrf.mxu0
  %v432 = vadd.f32 0.0, %v431
  %433 = vdwg.mxu0
  %vm434 = vcmask 64512
  %v436 = vsel %vm434, %v411, 0
  %v439 = vsel %vm434, %v414, 0
  %v442 = vsel %vm434, %v417, 0
  %v445 = vsel %vm434, %v420, 0
  %447 = vmatpush.msra.mxu0 0.0
  %448 = vmatpush.msra.mxu0 0.0
  %449 = vmatpush.msra.mxu0 0.0
  %450 = vmatpush.msra.mxu0 0.0
  %451 = vmatpush.msra.mxu0 0.0
  %452 = vmatpush.msra.mxu0 0.0
  %453 = vmatpush.msra.mxu0 0.0
  %454 = vmatpush.msra.mxu0 0.0
  %455 = vmatpush.msra.mxu0 0.0
  %456 = vmatpush.msra.mxu0 0.0
  %457 = vmatpush.msra.mxu0 0.0
  %458 = vmatpush.msra.mxu0 0.0
  %459 = vmatpush.msra.mxu0 0.0
  %460 = vmatpush.msra.mxu0 0.0
  %461 = vmatpush.msra.mxu0 0.0
  %462 = vmatpush.msra.mxu0 %v46
  %463 = vmatmul.f32.gmra.mxu0 %v436
  %v464 = vpop.f32.mrf.mxu0
  %v465 = vadd.f32 0.0, %v464
  %466 = vmatmul.f32.gmra.mxu0 %v439
  %v467 = vpop.f32.mrf.mxu0
  %v468 = vadd.f32 0.0, %v467
  %469 = vmatmul.f32.gmra.mxu0 %v442
  %v470 = vpop.f32.mrf.mxu0
  %v471 = vadd.f32 0.0, %v470
  %472 = vmatmul.f32.gmra.mxu0 %v445
  %v473 = vpop.f32.mrf.mxu0
  %v474 = vadd.f32 0.0, %v473
  %475 = vdwg.mxu0
  %476 = vmatpush.msra.mxu0 0.0
  %477 = vmatpush.msra.mxu0 0.0
  %478 = vmatpush.msra.mxu0 0.0
  %479 = vmatpush.msra.mxu0 0.0
  %480 = vmatpush.msra.mxu0 0.0
  %481 = vmatpush.msra.mxu0 0.0
  %482 = vmatpush.msra.mxu0 0.0
  %483 = vmatpush.msra.mxu0 0.0
  %484 = vmatpush.msra.mxu0 0.0
  %485 = vmatpush.msra.mxu0 0.0
  %486 = vmatpush.msra.mxu0 0.0
  %487 = vmatpush.msra.mxu0 0.0
  %488 = vmatpush.msra.mxu0 0.0
  %489 = vmatpush.msra.mxu0 0.0
  %490 = vmatpush.msra.mxu0 0.0
  %491 = vmatpush.msra.mxu0 %v47
  %492 = vmatmul.f32.gmra.mxu0 %v436
  %v493 = vpop.f32.mrf.mxu0
  %v494 = vadd.f32 0.0, %v493
  %495 = vmatmul.f32.gmra.mxu0 %v439
  %v496 = vpop.f32.mrf.mxu0
  %v497 = vadd.f32 0.0, %v496
  %498 = vmatmul.f32.gmra.mxu0 %v442
  %v499 = vpop.f32.mrf.mxu0
  %v500 = vadd.f32 0.0, %v499
  %501 = vmatmul.f32.gmra.mxu0 %v445
  %v502 = vpop.f32.mrf.mxu0
  %v503 = vadd.f32 0.0, %v502
  %504 = vdwg.mxu0
  %v505 = vsel %vm434, %v382, 0
  %v507 = vsel %vm434, %v384, 0
  %v509 = vsel %vm434, %v386, 0
  %v511 = vsel %vm434, %v388, 0
  %513 = vmatpush.msra.mxu0 0.0
  %514 = vmatpush.msra.mxu0 0.0
  %515 = vmatpush.msra.mxu0 0.0
  %516 = vmatpush.msra.mxu0 0.0
  %517 = vmatpush.msra.mxu0 0.0
  %518 = vmatpush.msra.mxu0 0.0
  %519 = vmatpush.msra.mxu0 0.0
  %520 = vmatpush.msra.mxu0 0.0
  %521 = vmatpush.msra.mxu0 0.0
  %522 = vmatpush.msra.mxu0 0.0
  %523 = vmatpush.msra.mxu0 0.0
  %524 = vmatpush.msra.mxu0 0.0
  %525 = vmatpush.msra.mxu0 0.0
  %526 = vmatpush.msra.mxu0 0.0
  %527 = vmatpush.msra.mxu0 0.0
  %528 = vmatpush.msra.mxu0 %v44
  %529 = vmatmul.f32.gmra.mxu0 %v505
  %v530 = vpop.f32.mrf.mxu0
  %v531 = vadd.f32 %v465, %v530
  %532 = vmatmul.f32.gmra.mxu0 %v507
  %v533 = vpop.f32.mrf.mxu0
  %v534 = vadd.f32 %v468, %v533
  %535 = vmatmul.f32.gmra.mxu0 %v509
  %v536 = vpop.f32.mrf.mxu0
  %v537 = vadd.f32 %v471, %v536
  %538 = vmatmul.f32.gmra.mxu0 %v511
  %v539 = vpop.f32.mrf.mxu0
  %v540 = vadd.f32 %v474, %v539
  %541 = vdwg.mxu0
  %542 = vmatpush.msra.mxu0 0.0
  %543 = vmatpush.msra.mxu0 0.0
  %544 = vmatpush.msra.mxu0 0.0
  %545 = vmatpush.msra.mxu0 0.0
  %546 = vmatpush.msra.mxu0 0.0
  %547 = vmatpush.msra.mxu0 0.0
  %548 = vmatpush.msra.mxu0 0.0
  %549 = vmatpush.msra.mxu0 0.0
  %550 = vmatpush.msra.mxu0 0.0
  %551 = vmatpush.msra.mxu0 0.0
  %552 = vmatpush.msra.mxu0 0.0
  %553 = vmatpush.msra.mxu0 0.0
  %554 = vmatpush.msra.mxu0 0.0
  %555 = vmatpush.msra.mxu0 0.0
  %556 = vmatpush.msra.mxu0 0.0
  %557 = vmatpush.msra.mxu0 %v45
  %558 = vmatmul.f32.gmra.mxu0 %v505
  %v559 = vpop.f32.mrf.mxu0
  %v560 = vadd.f32 %v494, %v559
  %561 = vmatmul.f32.gmra.mxu0 %v507
  %v562 = vpop.f32.mrf.mxu0
  %v563 = vadd.f32 %v497, %v562
  %564 = vmatmul.f32.gmra.mxu0 %v509
  %v565 = vpop.f32.mrf.mxu0
  %v566 = vadd.f32 %v500, %v565
  %567 = vmatmul.f32.gmra.mxu0 %v511
  %v568 = vpop.f32.mrf.mxu0
  %v569 = vadd.f32 %v503, %v568
  %570 = vdwg.mxu0
  %v572 = vsel %vm434, %v423, 0
  %v575 = vsel %vm434, %v426, 0
  %v578 = vsel %vm434, %v429, 0
  %v581 = vsel %vm434, %v432, 0
  %583 = vmatpush.msra.mxu0 0.0
  %584 = vmatpush.msra.mxu0 0.0
  %585 = vmatpush.msra.mxu0 0.0
  %586 = vmatpush.msra.mxu0 0.0
  %587 = vmatpush.msra.mxu0 0.0
  %588 = vmatpush.msra.mxu0 0.0
  %589 = vmatpush.msra.mxu0 0.0
  %590 = vmatpush.msra.mxu0 0.0
  %591 = vmatpush.msra.mxu0 0.0
  %592 = vmatpush.msra.mxu0 0.0
  %593 = vmatpush.msra.mxu0 0.0
  %594 = vmatpush.msra.mxu0 0.0
  %595 = vmatpush.msra.mxu0 0.0
  %596 = vmatpush.msra.mxu0 0.0
  %597 = vmatpush.msra.mxu0 0.0
  %598 = vmatpush.msra.mxu0 %v48
  %599 = vmatmul.f32.gmra.mxu0 %v572
  %v600 = vpop.f32.mrf.mxu0
  %v601 = vadd.f32 0.0, %v600
  %602 = vmatmul.f32.gmra.mxu0 %v575
  %v603 = vpop.f32.mrf.mxu0
  %v604 = vadd.f32 0.0, %v603
  %605 = vmatmul.f32.gmra.mxu0 %v578
  %v606 = vpop.f32.mrf.mxu0
  %v607 = vadd.f32 0.0, %v606
  %608 = vmatmul.f32.gmra.mxu0 %v581
  %v609 = vpop.f32.mrf.mxu0
  %v610 = vadd.f32 0.0, %v609
  %611 = vdwg.mxu0
  %612 = vmatpush.msra.mxu0 0.0
  %613 = vmatpush.msra.mxu0 0.0
  %614 = vmatpush.msra.mxu0 0.0
  %615 = vmatpush.msra.mxu0 0.0
  %616 = vmatpush.msra.mxu0 0.0
  %617 = vmatpush.msra.mxu0 0.0
  %618 = vmatpush.msra.mxu0 0.0
  %619 = vmatpush.msra.mxu0 0.0
  %620 = vmatpush.msra.mxu0 0.0
  %621 = vmatpush.msra.mxu0 0.0
  %622 = vmatpush.msra.mxu0 0.0
  %623 = vmatpush.msra.mxu0 0.0
  %624 = vmatpush.msra.mxu0 0.0
  %625 = vmatpush.msra.mxu0 0.0
  %626 = vmatpush.msra.mxu0 0.0
  %627 = vmatpush.msra.mxu0 %v49
  %628 = vmatmul.f32.gmra.mxu0 %v572
  %v629 = vpop.f32.mrf.mxu0
  %v630 = vadd.f32 0.0, %v629
  %631 = vmatmul.f32.gmra.mxu0 %v575
  %v632 = vpop.f32.mrf.mxu0
  %v633 = vadd.f32 0.0, %v632
  %634 = vmatmul.f32.gmra.mxu0 %v578
  %v635 = vpop.f32.mrf.mxu0
  %v636 = vadd.f32 0.0, %v635
  %637 = vmatmul.f32.gmra.mxu0 %v581
  %v638 = vpop.f32.mrf.mxu0
  %v639 = vadd.f32 0.0, %v638
  %640 = vdwg.mxu0
  %v641 = vadd.f32 %v531, %v601
  %v642 = vadd.f32 %v560, %v630
  %v643 = vadd.f32 %v534, %v604
  %v644 = vadd.f32 %v563, %v633
  %v645 = vadd.f32 %v537, %v607
  %v646 = vadd.f32 %v566, %v636
  %v647 = vadd.f32 %v540, %v610
  %v648 = vadd.f32 %v569, %v639
  %v649 = vadd.f32 %v374, %v642
  %v650 = vadd.f32 %v376, %v644
  %v651 = vadd.f32 %v378, %v646
  %v652 = vadd.f32 %v380, %v648
  %v653 = vperm.slane %v52, 4
  %v654 = vadd.f32 %v649, %v653
  %v655 = vadd.f32 %v650, %v653
  %v656 = vadd.f32 %v651, %v653
  %v657 = vadd.f32 %v652, %v653
  %v658 = vxor.u32 %v654, 2147483648
  %v659 = vxor.u32 %v655, 2147483648
  %v660 = vxor.u32 %v656, 2147483648
  %v661 = vxor.u32 %v657, 2147483648
  %v662 = vmul.f32 %v658, 1.442695
  %v663 = vpow.pop %v662
  %v664 = vmul.f32 %v659, 1.442695
  %v665 = vpow.pop %v664
  %v666 = vmul.f32 %v660, 1.442695
  %v667 = vpow.pop %v666
  %v668 = vmul.f32 %v661, 1.442695
  %v669 = vpow.pop %v668
  %v670 = vadd.f32 %v663, 1.0
  %v671 = vadd.f32 %v665, 1.0
  %v672 = vadd.f32 %v667, 1.0
  %v673 = vadd.f32 %v669, 1.0
  %v674 = vrcp.pop %v670
  %v675 = vmul.f32 %v670, %v674
  %v676 = vsub.f32 1.0, %v675
  %v677 = vmul.f32 %v674, %v676
  %v678 = vadd.f32 %v674, %v677
  %vm679 = vweird.f32 %v670
  %vm680 = vweird.f32 %v674
  %vm681 = vmor %vm679, %vm680
  %v682 = vsel %vm681, %v674, %v678
  %v683 = vand.u32 2147483647, %v670
  %vm684 = vcmp.eq.f32.partialorder %v683, 8.507059e+37
  %v685 = vand.u32 %v670, 2147483648
  %v686 = vor.u32 1.1754944e-38, %v685
  %v687 = vsel %vm684, %v686, %v682
  %v688 = vmul.f32 1.0, %v687
  %v689 = vrcp.pop %v671
  %v690 = vmul.f32 %v671, %v689
  %v691 = vsub.f32 1.0, %v690
  %v692 = vmul.f32 %v689, %v691
  %v693 = vadd.f32 %v689, %v692
  %vm694 = vweird.f32 %v671
  %vm695 = vweird.f32 %v689
  %vm696 = vmor %vm694, %vm695
  %v697 = vsel %vm696, %v689, %v693
  %v698 = vand.u32 2147483647, %v671
  %vm699 = vcmp.eq.f32.partialorder %v698, 8.507059e+37
  %v700 = vand.u32 %v671, 2147483648
  %v701 = vor.u32 1.1754944e-38, %v700
  %v702 = vsel %vm699, %v701, %v697
  %v703 = vmul.f32 1.0, %v702
  %v704 = vrcp.pop %v672
  %v705 = vmul.f32 %v672, %v704
  %v706 = vsub.f32 1.0, %v705
  %v707 = vmul.f32 %v704, %v706
  %v708 = vadd.f32 %v704, %v707
  %vm709 = vweird.f32 %v672
  %vm710 = vweird.f32 %v704
  %vm711 = vmor %vm709, %vm710
  %v712 = vsel %vm711, %v704, %v708
  %v713 = vand.u32 2147483647, %v672
  %vm714 = vcmp.eq.f32.partialorder %v713, 8.507059e+37
  %v715 = vand.u32 %v672, 2147483648
  %v716 = vor.u32 1.1754944e-38, %v715
  %v717 = vsel %vm714, %v716, %v712
  %v718 = vmul.f32 1.0, %v717
  %v719 = vrcp.pop %v673
  %v720 = vmul.f32 %v673, %v719
  %v721 = vsub.f32 1.0, %v720
  %v722 = vmul.f32 %v719, %v721
  %v723 = vadd.f32 %v719, %v722
  %vm724 = vweird.f32 %v673
  %vm725 = vweird.f32 %v719
  %vm726 = vmor %vm724, %vm725
  %v727 = vsel %vm726, %v719, %v723
  %v728 = vand.u32 2147483647, %v673
  %vm729 = vcmp.eq.f32.partialorder %v728, 8.507059e+37
  %v730 = vand.u32 %v673, 2147483648
  %v731 = vor.u32 1.1754944e-38, %v730
  %v732 = vsel %vm729, %v731, %v727
  %v733 = vmul.f32 1.0, %v732
  %v734 = vperm.slane %v52, 2
  %vm735 = vcmask 80896
  %v737 = vsel %vm735, %v688, 0
  %v740 = vsel %vm735, %v703, 0
  %v743 = vsel %vm735, %v718, 0
  %v746 = vsel %vm735, %v733, 0
  %v749 = vsel %vm160, %v51, 0
  %751 = vmatpush.msra.mxu0 0.0
  %752 = vmatpush.msra.mxu0 0.0
  %753 = vmatpush.msra.mxu0 0.0
  %754 = vmatpush.msra.mxu0 0.0
  %755 = vmatpush.msra.mxu0 0.0
  %756 = vmatpush.msra.mxu0 0.0
  %757 = vmatpush.msra.mxu0 0.0
  %758 = vmatpush.msra.mxu0 0.0
  %759 = vmatpush.msra.mxu0 0.0
  %760 = vmatpush.msra.mxu0 0.0
  %761 = vmatpush.msra.mxu0 0.0
  %762 = vmatpush.msra.mxu0 0.0
  %763 = vmatpush.msra.mxu0 0.0
  %764 = vmatpush.msra.mxu0 0.0
  %765 = vmatpush.msra.mxu0 %v749
  %766 = vmatpush.msra.mxu0 %v50
  %767 = vmatmul.f32.gmra.mxu0 %v737
  %v768 = vpop.f32.mrf.mxu0
  %v769 = vadd.f32 %v734, %v768
  %770 = vmatmul.f32.gmra.mxu0 %v740
  %v771 = vpop.f32.mrf.mxu0
  %v772 = vadd.f32 %v734, %v771
  %773 = vmatmul.f32.gmra.mxu0 %v743
  %v774 = vpop.f32.mrf.mxu0
  %v775 = vadd.f32 %v734, %v774
  %776 = vmatmul.f32.gmra.mxu0 %v746
  %v777 = vpop.f32.mrf.mxu0
  %v778 = vadd.f32 %v734, %v777
  %779 = vdwg.mxu0
  %v780 = vxor.u32 %v769, 2147483648
  %v781 = vxor.u32 %v772, 2147483648
  %v782 = vxor.u32 %v775, 2147483648
  %v783 = vxor.u32 %v778, 2147483648
  %v784 = vmul.f32 %v780, 1.442695
  %v785 = vpow.pop %v784
  %v786 = vmul.f32 %v781, 1.442695
  %v787 = vpow.pop %v786
  %v788 = vmul.f32 %v782, 1.442695
  %v789 = vpow.pop %v788
  %v790 = vmul.f32 %v783, 1.442695
  %v791 = vpow.pop %v790
  %v792 = vadd.f32 %v785, 1.0
  %v793 = vadd.f32 %v787, 1.0
  %v794 = vadd.f32 %v789, 1.0
  %v795 = vadd.f32 %v791, 1.0
  %v796 = vrcp.pop %v792
  %v797 = vmul.f32 %v792, %v796
  %v798 = vsub.f32 1.0, %v797
  %v799 = vmul.f32 %v796, %v798
  %v800 = vadd.f32 %v796, %v799
  %vm801 = vweird.f32 %v792
  %vm802 = vweird.f32 %v796
  %vm803 = vmor %vm801, %vm802
  %v804 = vsel %vm803, %v796, %v800
  %v805 = vand.u32 2147483647, %v792
  %vm806 = vcmp.eq.f32.partialorder %v805, 8.507059e+37
  %v807 = vand.u32 %v792, 2147483648
  %v808 = vor.u32 1.1754944e-38, %v807
  %v809 = vsel %vm806, %v808, %v804
  %v810 = vmul.f32 1.0, %v809
  %v811 = vrcp.pop %v793
  %v812 = vmul.f32 %v793, %v811
  %v813 = vsub.f32 1.0, %v812
  %v814 = vmul.f32 %v811, %v813
  %v815 = vadd.f32 %v811, %v814
  %vm816 = vweird.f32 %v793
  %vm817 = vweird.f32 %v811
  %vm818 = vmor %vm816, %vm817
  %v819 = vsel %vm818, %v811, %v815
  %v820 = vand.u32 2147483647, %v793
  %vm821 = vcmp.eq.f32.partialorder %v820, 8.507059e+37
  %v822 = vand.u32 %v793, 2147483648
  %v823 = vor.u32 1.1754944e-38, %v822
  %v824 = vsel %vm821, %v823, %v819
  %v825 = vmul.f32 1.0, %v824
  %v826 = vrcp.pop %v794
  %v827 = vmul.f32 %v794, %v826
  %v828 = vsub.f32 1.0, %v827
  %v829 = vmul.f32 %v826, %v828
  %v830 = vadd.f32 %v826, %v829
  %vm831 = vweird.f32 %v794
  %vm832 = vweird.f32 %v826
  %vm833 = vmor %vm831, %vm832
  %v834 = vsel %vm833, %v826, %v830
  %v835 = vand.u32 2147483647, %v794
  %vm836 = vcmp.eq.f32.partialorder %v835, 8.507059e+37
  %v837 = vand.u32 %v794, 2147483648
  %v838 = vor.u32 1.1754944e-38, %v837
  %v839 = vsel %vm836, %v838, %v834
  %v840 = vmul.f32 1.0, %v839
  %v841 = vrcp.pop %v795
  %v842 = vmul.f32 %v795, %v841
  %v843 = vsub.f32 1.0, %v842
  %v844 = vmul.f32 %v841, %v843
  %v845 = vadd.f32 %v841, %v844
  %vm846 = vweird.f32 %v795
  %vm847 = vweird.f32 %v841
  %vm848 = vmor %vm846, %vm847
  %v849 = vsel %vm848, %v841, %v845
  %v850 = vand.u32 2147483647, %v795
  %vm851 = vcmp.eq.f32.partialorder %v850, 8.507059e+37
  %v852 = vand.u32 %v795, 2147483648
  %v853 = vor.u32 1.1754944e-38, %v852
  %v854 = vsel %vm851, %v853, %v849
  %v855 = vmul.f32 1.0, %v854
  %v856 = vperm.slane %v52, 3
  %vm858 = vcmask 1045504
  %v859 = vrot.slane %v51, 2
  %v860 = vrot.slane %v52, 2
  %v861 = vsel %vm858, %v859, %v860
  %v864 = vsel %vm434, %v810, 0
  %v867 = vsel %vm434, %v825, 0
  %v870 = vsel %vm434, %v840, 0
  %v873 = vsel %vm434, %v855, 0
  %875 = vmatpush.msra.mxu0 0.0
  %876 = vmatpush.msra.mxu0 0.0
  %877 = vmatpush.msra.mxu0 0.0
  %878 = vmatpush.msra.mxu0 0.0
  %879 = vmatpush.msra.mxu0 0.0
  %880 = vmatpush.msra.mxu0 0.0
  %881 = vmatpush.msra.mxu0 0.0
  %882 = vmatpush.msra.mxu0 0.0
  %883 = vmatpush.msra.mxu0 0.0
  %884 = vmatpush.msra.mxu0 0.0
  %885 = vmatpush.msra.mxu0 0.0
  %886 = vmatpush.msra.mxu0 0.0
  %887 = vmatpush.msra.mxu0 0.0
  %888 = vmatpush.msra.mxu0 0.0
  %889 = vmatpush.msra.mxu0 0.0
  %890 = vmatpush.msra.mxu0 %v861
  %891 = vmatmul.f32.gmra.mxu0 %v864
  %v892 = vpop.f32.mrf.mxu0
  %v893 = vadd.f32 %v856, %v892
  %894 = vmatmul.f32.gmra.mxu0 %v867
  %v895 = vpop.f32.mrf.mxu0
  %v896 = vadd.f32 %v856, %v895
  %897 = vmatmul.f32.gmra.mxu0 %v870
  %v898 = vpop.f32.mrf.mxu0
  %v899 = vadd.f32 %v856, %v898
  %900 = vmatmul.f32.gmra.mxu0 %v873
  %v901 = vpop.f32.mrf.mxu0
  %v902 = vadd.f32 %v856, %v901
  %903 = vdwg.mxu0
  %v904 = vmul.f32 %v26, 3.0
  %v905 = vmul.f32 %v27, 3.0
  %v906 = vmul.f32 %v28, 3.0
  %v907 = vmul.f32 %v29, 3.0
  %912 = vrot.lane.b32.xlu0 %v893, 10
  %v913 = vpop.permute.xlu0 %912
  %914 = vrot.lane.b32.xlu0 %v896, 10
  %v915 = vpop.permute.xlu0 %914
  %916 = vrot.lane.b32.xlu0 %v899, 10
  %v917 = vpop.permute.xlu0 %916
  %918 = vrot.lane.b32.xlu0 %v902, 10
  %v919 = vpop.permute.xlu0 %918
  %v924 = vmul.f32 %v904, %v913
  %v925 = vmul.f32 %v905, %v915
  %v926 = vmul.f32 %v906, %v917
  %v927 = vmul.f32 %v907, %v919
  %v928 = vtanh.pop %v924
  %v929 = vtanh.pop %v925
  %v930 = vtanh.pop %v926
  %v931 = vtanh.pop %v927
  %936 = vrot.lane.b32.xlu0 %v928, 118
  %v937 = vpop.permute.xlu0 %936
  %938 = vrot.lane.b32.xlu0 %v929, 118
  %v939 = vpop.permute.xlu0 %938
  %940 = vrot.lane.b32.xlu0 %v930, 118
  %v941 = vpop.permute.xlu0 %940
  %942 = vrot.lane.b32.xlu0 %v931, 118
  %v943 = vpop.permute.xlu0 %942
  %v944 = vsel %vm434, %v937, 0
  %v946 = vsel %vm434, %v939, 0
  %v948 = vsel %vm434, %v941, 0
  %v950 = vsel %vm434, %v943, 0
  %952 = vmatpush.xpose.msra.mxu0 0.0
  %953 = vmatpush.xpose.msra.mxu0 0.0
  %954 = vmatpush.xpose.msra.mxu0 0.0
  %955 = vmatpush.xpose.msra.mxu0 0.0
  %956 = vmatpush.xpose.msra.mxu0 0.0
  %957 = vmatpush.xpose.msra.mxu0 0.0
  %958 = vmatpush.xpose.msra.mxu0 0.0
  %959 = vmatpush.xpose.msra.mxu0 0.0
  %960 = vmatpush.xpose.msra.mxu0 0.0
  %961 = vmatpush.xpose.msra.mxu0 0.0
  %962 = vmatpush.xpose.msra.mxu0 0.0
  %963 = vmatpush.xpose.msra.mxu0 0.0
  %964 = vmatpush.xpose.msra.mxu0 %v950
  %965 = vmatpush.xpose.msra.mxu0 %v948
  %966 = vmatpush.xpose.msra.mxu0 %v946
  %967 = vmatpush.xpose.msra.mxu0 %v944
  %968 = vmatmul.f32.gmra.mxu0 %v944
  %v969 = vpop.f32.mrf.mxu0
  %v970 = vadd.f32 0.0, %v969
  %971 = vmatmul.f32.gmra.mxu0 %v946
  %v972 = vpop.f32.mrf.mxu0
  %v973 = vadd.f32 0.0, %v972
  %974 = vmatmul.f32.gmra.mxu0 %v948
  %v975 = vpop.f32.mrf.mxu0
  %v976 = vadd.f32 0.0, %v975
  %977 = vmatmul.f32.gmra.mxu0 %v950
  %v978 = vpop.f32.mrf.mxu0
  %v979 = vadd.f32 0.0, %v978
  %980 = vdwg.mxu0
  %v981 = vmul.f32 %v970, 3.0
  %v982 = vmul.f32 %v973, 3.0
  %v983 = vmul.f32 %v976, 3.0
  %v984 = vmul.f32 %v979, 3.0
  %v985 = vtanh.pop %v981
  %v986 = vtanh.pop %v982
  %v987 = vtanh.pop %v983
  %v988 = vtanh.pop %v984
  %v989 = vmax.f32 %v985, 0.0
  %v990 = vmax.f32 %v986, 0.0
  %v991 = vmax.f32 %v987, 0.0
  %v992 = vmax.f32 %v988, 0.0
  %v993 = vmul.f32 %v38, %v989
  %v994 = vmul.f32 %v39, %v990
  %v995 = vmul.f32 %v40, %v991
  %v996 = vmul.f32 %v41, %v992
  %v997 = vadd.f32 %v373, %v641
  %v998 = vadd.f32 %v375, %v643
  %v999 = vadd.f32 %v377, %v645
  %v1000 = vadd.f32 %v379, %v647
  %v1001 = vmul.f32 %v53, %v997
  %v1002 = vmul.f32 %v55, %v998
  %v1003 = vmul.f32 %v57, %v999
  %v1004 = vmul.f32 %v59, %v1000
  %1005 = vmatpush.msra.mxu0 %v76
  %1006 = vmatpush.msra.mxu0 %v75
  %1007 = vmatpush.msra.mxu0 %v74
  %1008 = vmatpush.msra.mxu0 %v73
  %1009 = vmatpush.msra.mxu0 %v72
  %1010 = vmatpush.msra.mxu0 %v71
  %1011 = vmatpush.msra.mxu0 %v70
  %1012 = vmatpush.msra.mxu0 %v69
  %1013 = vmatpush.msra.mxu0 %v68
  %1014 = vmatpush.msra.mxu0 %v67
  %1015 = vmatpush.msra.mxu0 %v66
  %1016 = vmatpush.msra.mxu0 %v65
  %1017 = vmatpush.msra.mxu0 %v64
  %1018 = vmatpush.msra.mxu0 %v63
  %1019 = vmatpush.msra.mxu0 %v62
  %1020 = vmatpush.msra.mxu0 %v61
  %1021 = vmatmul.f32.gmra.mxu0 %v1001
  %v1022 = vpop.f32.mrf.mxu0
  %v1023 = vadd.f32 0.0, %v1022
  %1024 = vmatmul.f32.gmra.mxu0 %v1002
  %v1025 = vpop.f32.mrf.mxu0
  %v1026 = vadd.f32 0.0, %v1025
  %1027 = vmatmul.f32.gmra.mxu0 %v1003
  %v1028 = vpop.f32.mrf.mxu0
  %v1029 = vadd.f32 0.0, %v1028
  %1030 = vmatmul.f32.gmra.mxu0 %v1004
  %v1031 = vpop.f32.mrf.mxu0
  %v1032 = vadd.f32 0.0, %v1031
  %1033 = vdwg.mxu0
  %v1034 = vadd.f32 %v54, %v1023
  %v1035 = vadd.f32 %v56, %v1026
  %v1036 = vadd.f32 %v58, %v1029
  %v1037 = vadd.f32 %v60, %v1032
  %1042 = vrot.lane.b32.xlu0 %v649, 118
  %v1043 = vpop.permute.xlu0 %1042
  %1044 = vrot.lane.b32.xlu0 %v650, 118
  %v1045 = vpop.permute.xlu0 %1044
  %1046 = vrot.lane.b32.xlu0 %v651, 118
  %v1047 = vpop.permute.xlu0 %1046
  %1048 = vrot.lane.b32.xlu0 %v652, 118
  %v1049 = vpop.permute.xlu0 %1048
  %v1055 = vsel %vm77, %v993, 0
  %v1058 = vsel %vm77, %v994, 0
  %v1061 = vsel %vm77, %v995, 0
  %v1064 = vsel %vm77, %v996, 0
  %1066 = vmatpush.msra.mxu0 0.0
  %1067 = vmatpush.msra.mxu0 0.0
  %1068 = vmatpush.msra.mxu0 0.0
  %1069 = vmatpush.msra.mxu0 0.0
  %1070 = vmatpush.msra.mxu0 0.0
  %1071 = vmatpush.msra.mxu0 0.0
  %1072 = vmatpush.msra.mxu0 0.0
  %1073 = vmatpush.msra.mxu0 0.0
  %1074 = vmatpush.msra.mxu0 0.0
  %1075 = vmatpush.msra.mxu0 0.0
  %1076 = vmatpush.msra.mxu0 0.0
  %1077 = vmatpush.msra.mxu0 0.0
  %1078 = vmatpush.msra.mxu0 %v1049
  %1079 = vmatpush.msra.mxu0 %v1047
  %1080 = vmatpush.msra.mxu0 %v1045
  %1081 = vmatpush.msra.mxu0 %v1043
  %1082 = vmatmul.f32.gmra.mxu0 %v1055
  %v1083 = vpop.f32.mrf.mxu0
  %v1084 = vadd.f32 0.0, %v1083
  %1085 = vmatmul.f32.gmra.mxu0 %v1058
  %v1086 = vpop.f32.mrf.mxu0
  %v1087 = vadd.f32 0.0, %v1086
  %1088 = vmatmul.f32.gmra.mxu0 %v1061
  %v1089 = vpop.f32.mrf.mxu0
  %v1090 = vadd.f32 0.0, %v1089
  %1091 = vmatmul.f32.gmra.mxu0 %v1064
  %v1092 = vpop.f32.mrf.mxu0
  %v1093 = vadd.f32 0.0, %v1092
  %1094 = vdwg.mxu0
  %v1095 = vadd.f32 %v1034, %v1084
  %v1096 = vadd.f32 %v1035, %v1087
  %v1097 = vadd.f32 %v1036, %v1090
  %v1098 = vadd.f32 %v1037, %v1093
  %v1099 = vxor.u32 %v1095, 2147483648
  %v1100 = vxor.u32 %v1096, 2147483648
  %v1101 = vxor.u32 %v1097, 2147483648
  %v1102 = vxor.u32 %v1098, 2147483648
  %v1103 = vmul.f32 %v1099, 1.442695
  %v1104 = vpow.pop %v1103
  %v1105 = vmul.f32 %v1100, 1.442695
  %v1106 = vpow.pop %v1105
  %v1107 = vmul.f32 %v1101, 1.442695
  %v1108 = vpow.pop %v1107
  %v1109 = vmul.f32 %v1102, 1.442695
  %v1110 = vpow.pop %v1109
  %v1111 = vadd.f32 %v1104, 1.0
  %v1112 = vadd.f32 %v1106, 1.0
  %v1113 = vadd.f32 %v1108, 1.0
  %v1114 = vadd.f32 %v1110, 1.0
  %v1115 = vrcp.pop %v1111
  %v1116 = vmul.f32 %v1111, %v1115
  %v1117 = vsub.f32 1.0, %v1116
  %v1118 = vmul.f32 %v1115, %v1117
  %v1119 = vadd.f32 %v1115, %v1118
  %vm1120 = vweird.f32 %v1111
  %vm1121 = vweird.f32 %v1115
  %vm1122 = vmor %vm1120, %vm1121
  %v1123 = vsel %vm1122, %v1115, %v1119
  %v1124 = vand.u32 2147483647, %v1111
  %vm1125 = vcmp.eq.f32.partialorder %v1124, 8.507059e+37
  %v1126 = vand.u32 %v1111, 2147483648
  %v1127 = vor.u32 1.1754944e-38, %v1126
  %v1128 = vsel %vm1125, %v1127, %v1123
  %v1129 = vmul.f32 1.0, %v1128
  %v1130 = vrcp.pop %v1112
  %v1131 = vmul.f32 %v1112, %v1130
  %v1132 = vsub.f32 1.0, %v1131
  %v1133 = vmul.f32 %v1130, %v1132
  %v1134 = vadd.f32 %v1130, %v1133
  %vm1135 = vweird.f32 %v1112
  %vm1136 = vweird.f32 %v1130
  %vm1137 = vmor %vm1135, %vm1136
  %v1138 = vsel %vm1137, %v1130, %v1134
  %v1139 = vand.u32 2147483647, %v1112
  %vm1140 = vcmp.eq.f32.partialorder %v1139, 8.507059e+37
  %v1141 = vand.u32 %v1112, 2147483648
  %v1142 = vor.u32 1.1754944e-38, %v1141
  %v1143 = vsel %vm1140, %v1142, %v1138
  %v1144 = vmul.f32 1.0, %v1143
  %v1145 = vrcp.pop %v1113
  %v1146 = vmul.f32 %v1113, %v1145
  %v1147 = vsub.f32 1.0, %v1146
  %v1148 = vmul.f32 %v1145, %v1147
  %v1149 = vadd.f32 %v1145, %v1148
  %vm1150 = vweird.f32 %v1113
  %vm1151 = vweird.f32 %v1145
  %vm1152 = vmor %vm1150, %vm1151
  %v1153 = vsel %vm1152, %v1145, %v1149
  %v1154 = vand.u32 2147483647, %v1113
  %vm1155 = vcmp.eq.f32.partialorder %v1154, 8.507059e+37
  %v1156 = vand.u32 %v1113, 2147483648
  %v1157 = vor.u32 1.1754944e-38, %v1156
  %v1158 = vsel %vm1155, %v1157, %v1153
  %v1159 = vmul.f32 1.0, %v1158
  %v1160 = vrcp.pop %v1114
  %v1161 = vmul.f32 %v1114, %v1160
  %v1162 = vsub.f32 1.0, %v1161
  %v1163 = vmul.f32 %v1160, %v1162
  %v1164 = vadd.f32 %v1160, %v1163
  %vm1165 = vweird.f32 %v1114
  %vm1166 = vweird.f32 %v1160
  %vm1167 = vmor %vm1165, %vm1166
  %v1168 = vsel %vm1167, %v1160, %v1164
  %v1169 = vand.u32 2147483647, %v1114
  %vm1170 = vcmp.eq.f32.partialorder %v1169, 8.507059e+37
  %v1171 = vand.u32 %v1114, 2147483648
  %v1172 = vor.u32 1.1754944e-38, %v1171
  %v1173 = vsel %vm1170, %v1172, %v1168
  %v1174 = vmul.f32 1.0, %v1173
  %v1175 = vmul.f32 %v1129, %v382
  %v1176 = vmul.f32 %v1144, %v384
  %v1177 = vmul.f32 %v1159, %v386
  %v1178 = vmul.f32 %v1174, %v388
  %1179 = vmatpush.msra.mxu0 0.0
  %1180 = vmatpush.msra.mxu0 0.0
  %1181 = vmatpush.msra.mxu0 0.0
  %1182 = vmatpush.msra.mxu0 0.0
  %1183 = vmatpush.msra.mxu0 0.0
  %1184 = vmatpush.msra.mxu0 0.0
  %1185 = vmatpush.msra.mxu0 0.0
  %1186 = vmatpush.msra.mxu0 0.0
  %1187 = vmatpush.msra.mxu0 0.0
  %1188 = vmatpush.msra.mxu0 0.0
  %1189 = vmatpush.msra.mxu0 0.0
  %1190 = vmatpush.msra.mxu0 0.0
  %1191 = vmatpush.msra.mxu0 %v1178
  %1192 = vmatpush.msra.mxu0 %v1177
  %1193 = vmatpush.msra.mxu0 %v1176
  %1194 = vmatpush.msra.mxu0 %v1175
  %1195 = vmatmul.f32.gmra.mxu0 %v79
  %v1196 = vpop.f32.mrf.mxu0
  %v1197 = vadd.f32 0.0, %v1196
  %1198 = vmatmul.f32.gmra.mxu0 %v82
  %v1199 = vpop.f32.mrf.mxu0
  %v1200 = vadd.f32 0.0, %v1199
  %1201 = vmatmul.f32.gmra.mxu0 %v85
  %v1202 = vpop.f32.mrf.mxu0
  %v1203 = vadd.f32 0.0, %v1202
  %1204 = vmatmul.f32.gmra.mxu0 %v88
  %v1205 = vpop.f32.mrf.mxu0
  %v1206 = vadd.f32 0.0, %v1205
  %1207 = vmatmul.f32.gmra.mxu0 %v91
  %v1208 = vpop.f32.mrf.mxu0
  %v1209 = vadd.f32 0.0, %v1208
  %1210 = vmatmul.f32.gmra.mxu0 %v94
  %v1211 = vpop.f32.mrf.mxu0
  %v1212 = vadd.f32 0.0, %v1211
  %1213 = vmatmul.f32.gmra.mxu0 %v97
  %v1214 = vpop.f32.mrf.mxu0
  %v1215 = vadd.f32 0.0, %v1214
  %1216 = vmatmul.f32.gmra.mxu0 %v100
  %v1217 = vpop.f32.mrf.mxu0
  %v1218 = vadd.f32 0.0, %v1217
  %1219 = vdwg.mxu0
  %1221 = vrot.lane.b32.xlu0 %v47, 102
  %v1222 = vpop.permute.xlu0 %1221
  %v1225 = vsel %vm434, %v1197, 0
  %v1228 = vsel %vm434, %v1200, 0
  %v1231 = vsel %vm434, %v1203, 0
  %v1234 = vsel %vm434, %v1206, 0
  %1236 = vmatpush.msra.mxu0 0.0
  %1237 = vmatpush.msra.mxu0 0.0
  %1238 = vmatpush.msra.mxu0 0.0
  %1239 = vmatpush.msra.mxu0 0.0
  %1240 = vmatpush.msra.mxu0 0.0
  %1241 = vmatpush.msra.mxu0 0.0
  %1242 = vmatpush.msra.mxu0 0.0
  %1243 = vmatpush.msra.mxu0 0.0
  %1244 = vmatpush.msra.mxu0 0.0
  %1245 = vmatpush.msra.mxu0 0.0
  %1246 = vmatpush.msra.mxu0 0.0
  %1247 = vmatpush.msra.mxu0 0.0
  %1248 = vmatpush.msra.mxu0 0.0
  %1249 = vmatpush.msra.mxu0 0.0
  %1250 = vmatpush.msra.mxu0 0.0
  %1251 = vmatpush.msra.mxu0 %v1222
  %1252 = vmatmul.f32.gmra.mxu0 %v1225
  %v1253 = vpop.f32.mrf.mxu0
  %v1254 = vadd.f32 0.0, %v1253
  %1255 = vmatmul.f32.gmra.mxu0 %v1228
  %v1256 = vpop.f32.mrf.mxu0
  %v1257 = vadd.f32 0.0, %v1256
  %1258 = vmatmul.f32.gmra.mxu0 %v1231
  %v1259 = vpop.f32.mrf.mxu0
  %v1260 = vadd.f32 0.0, %v1259
  %1261 = vmatmul.f32.gmra.mxu0 %v1234
  %v1262 = vpop.f32.mrf.mxu0
  %v1263 = vadd.f32 0.0, %v1262
  %1264 = vdwg.mxu0
  %1266 = vrot.lane.b32.xlu0 %v45, 102
  %v1267 = vpop.permute.xlu0 %1266
  %v1270 = vsel %vm434, %v1175, 0
  %v1273 = vsel %vm434, %v1176, 0
  %v1276 = vsel %vm434, %v1177, 0
  %v1279 = vsel %vm434, %v1178, 0
  %1281 = vmatpush.msra.mxu0 0.0
  %1282 = vmatpush.msra.mxu0 0.0
  %1283 = vmatpush.msra.mxu0 0.0
  %1284 = vmatpush.msra.mxu0 0.0
  %1285 = vmatpush.msra.mxu0 0.0
  %1286 = vmatpush.msra.mxu0 0.0
  %1287 = vmatpush.msra.mxu0 0.0
  %1288 = vmatpush.msra.mxu0 0.0
  %1289 = vmatpush.msra.mxu0 0.0
  %1290 = vmatpush.msra.mxu0 0.0
  %1291 = vmatpush.msra.mxu0 0.0
  %1292 = vmatpush.msra.mxu0 0.0
  %1293 = vmatpush.msra.mxu0 0.0
  %1294 = vmatpush.msra.mxu0 0.0
  %1295 = vmatpush.msra.mxu0 0.0
  %1296 = vmatpush.msra.mxu0 %v1267
  %1297 = vmatmul.f32.gmra.mxu0 %v1270
  %v1298 = vpop.f32.mrf.mxu0
  %v1299 = vadd.f32 %v1254, %v1298
  %1300 = vmatmul.f32.gmra.mxu0 %v1273
  %v1301 = vpop.f32.mrf.mxu0
  %v1302 = vadd.f32 %v1257, %v1301
  %1303 = vmatmul.f32.gmra.mxu0 %v1276
  %v1304 = vpop.f32.mrf.mxu0
  %v1305 = vadd.f32 %v1260, %v1304
  %1306 = vmatmul.f32.gmra.mxu0 %v1279
  %v1307 = vpop.f32.mrf.mxu0
  %v1308 = vadd.f32 %v1263, %v1307
  %1309 = vdwg.mxu0
  %1311 = vrot.lane.b32.xlu0 %v49, 102
  %v1312 = vpop.permute.xlu0 %1311
  %v1315 = vsel %vm434, %v1209, 0
  %v1318 = vsel %vm434, %v1212, 0
  %v1321 = vsel %vm434, %v1215, 0
  %v1324 = vsel %vm434, %v1218, 0
  %1326 = vmatpush.msra.mxu0 0.0
  %1327 = vmatpush.msra.mxu0 0.0
  %1328 = vmatpush.msra.mxu0 0.0
  %1329 = vmatpush.msra.mxu0 0.0
  %1330 = vmatpush.msra.mxu0 0.0
  %1331 = vmatpush.msra.mxu0 0.0
  %1332 = vmatpush.msra.mxu0 0.0
  %1333 = vmatpush.msra.mxu0 0.0
  %1334 = vmatpush.msra.mxu0 0.0
  %1335 = vmatpush.msra.mxu0 0.0
  %1336 = vmatpush.msra.mxu0 0.0
  %1337 = vmatpush.msra.mxu0 0.0
  %1338 = vmatpush.msra.mxu0 0.0
  %1339 = vmatpush.msra.mxu0 0.0
  %1340 = vmatpush.msra.mxu0 0.0
  %1341 = vmatpush.msra.mxu0 %v1312
  %1342 = vmatmul.f32.gmra.mxu0 %v1315
  %v1343 = vpop.f32.mrf.mxu0
  %v1344 = vadd.f32 0.0, %v1343
  %1345 = vmatmul.f32.gmra.mxu0 %v1318
  %v1346 = vpop.f32.mrf.mxu0
  %v1347 = vadd.f32 0.0, %v1346
  %1348 = vmatmul.f32.gmra.mxu0 %v1321
  %v1349 = vpop.f32.mrf.mxu0
  %v1350 = vadd.f32 0.0, %v1349
  %1351 = vmatmul.f32.gmra.mxu0 %v1324
  %v1352 = vpop.f32.mrf.mxu0
  %v1353 = vadd.f32 0.0, %v1352
  %1354 = vdwg.mxu0
  %v1355 = vadd.f32 %v1299, %v1344
  %v1356 = vadd.f32 %v1302, %v1347
  %v1357 = vadd.f32 %v1305, %v1350
  %v1358 = vadd.f32 %v1308, %v1353
  %1363 = vrot.lane.b32.xlu0 %v1355, 26
  %v1364 = vpop.permute.xlu0 %1363
  %1365 = vrot.lane.b32.xlu0 %v1356, 26
  %v1366 = vpop.permute.xlu0 %1365
  %1367 = vrot.lane.b32.xlu0 %v1357, 26
  %v1368 = vpop.permute.xlu0 %1367
  %1369 = vrot.lane.b32.xlu0 %v1358, 26
  %v1370 = vpop.permute.xlu0 %1369
  %v1375 = vadd.f32 %v374, %v1364
  %v1376 = vadd.f32 %v376, %v1366
  %v1377 = vadd.f32 %v378, %v1368
  %v1378 = vadd.f32 %v380, %v1370
  %v1379 = vperm.slane %v52, 5
  %1381 = vrot.lane.b32.xlu0 %v1379, 90
  %v1382 = vpop.permute.xlu0 %1381
  %v1384 = vadd.f32 %v1375, %v1382
  %v1385 = vadd.f32 %v1376, %v1382
  %v1386 = vadd.f32 %v1377, %v1382
  %v1387 = vadd.f32 %v1378, %v1382
  %v1388 = vxor.u32 %v1384, 2147483648
  %v1389 = vxor.u32 %v1385, 2147483648
  %v1390 = vxor.u32 %v1386, 2147483648
  %v1391 = vxor.u32 %v1387, 2147483648
  %v1392 = vmul.f32 %v1388, 1.442695
  %v1393 = vpow.pop %v1392
  %v1394 = vmul.f32 %v1389, 1.442695
  %v1395 = vpow.pop %v1394
  %v1396 = vmul.f32 %v1390, 1.442695
  %v1397 = vpow.pop %v1396
  %v1398 = vmul.f32 %v1391, 1.442695
  %v1399 = vpow.pop %v1398
  %v1400 = vadd.f32 %v1393, 1.0
  %v1401 = vadd.f32 %v1395, 1.0
  %v1402 = vadd.f32 %v1397, 1.0
  %v1403 = vadd.f32 %v1399, 1.0
  %v1404 = vrcp.pop %v1400
  %v1405 = vmul.f32 %v1400, %v1404
  %v1406 = vsub.f32 1.0, %v1405
  %v1407 = vmul.f32 %v1404, %v1406
  %v1408 = vadd.f32 %v1404, %v1407
  %vm1409 = vweird.f32 %v1400
  %vm1410 = vweird.f32 %v1404
  %vm1411 = vmor %vm1409, %vm1410
  %v1412 = vsel %vm1411, %v1404, %v1408
  %v1413 = vand.u32 2147483647, %v1400
  %vm1414 = vcmp.eq.f32.partialorder %v1413, 8.507059e+37
  %v1415 = vand.u32 %v1400, 2147483648
  %v1416 = vor.u32 1.1754944e-38, %v1415
  %v1417 = vsel %vm1414, %v1416, %v1412
  %v1418 = vmul.f32 1.0, %v1417
  %v1419 = vrcp.pop %v1401
  %v1420 = vmul.f32 %v1401, %v1419
  %v1421 = vsub.f32 1.0, %v1420
  %v1422 = vmul.f32 %v1419, %v1421
  %v1423 = vadd.f32 %v1419, %v1422
  %vm1424 = vweird.f32 %v1401
  %vm1425 = vweird.f32 %v1419
  %vm1426 = vmor %vm1424, %vm1425
  %v1427 = vsel %vm1426, %v1419, %v1423
  %v1428 = vand.u32 2147483647, %v1401
  %vm1429 = vcmp.eq.f32.partialorder %v1428, 8.507059e+37
  %v1430 = vand.u32 %v1401, 2147483648
  %v1431 = vor.u32 1.1754944e-38, %v1430
  %v1432 = vsel %vm1429, %v1431, %v1427
  %v1433 = vmul.f32 1.0, %v1432
  %v1434 = vrcp.pop %v1402
  %v1435 = vmul.f32 %v1402, %v1434
  %v1436 = vsub.f32 1.0, %v1435
  %v1437 = vmul.f32 %v1434, %v1436
  %v1438 = vadd.f32 %v1434, %v1437
  %vm1439 = vweird.f32 %v1402
  %vm1440 = vweird.f32 %v1434
  %vm1441 = vmor %vm1439, %vm1440
  %v1442 = vsel %vm1441, %v1434, %v1438
  %v1443 = vand.u32 2147483647, %v1402
  %vm1444 = vcmp.eq.f32.partialorder %v1443, 8.507059e+37
  %v1445 = vand.u32 %v1402, 2147483648
  %v1446 = vor.u32 1.1754944e-38, %v1445
  %v1447 = vsel %vm1444, %v1446, %v1442
  %v1448 = vmul.f32 1.0, %v1447
  %v1449 = vrcp.pop %v1403
  %v1450 = vmul.f32 %v1403, %v1449
  %v1451 = vsub.f32 1.0, %v1450
  %v1452 = vmul.f32 %v1449, %v1451
  %v1453 = vadd.f32 %v1449, %v1452
  %vm1454 = vweird.f32 %v1403
  %vm1455 = vweird.f32 %v1449
  %vm1456 = vmor %vm1454, %vm1455
  %v1457 = vsel %vm1456, %v1449, %v1453
  %v1458 = vand.u32 2147483647, %v1403
  %vm1459 = vcmp.eq.f32.partialorder %v1458, 8.507059e+37
  %v1460 = vand.u32 %v1403, 2147483648
  %v1461 = vor.u32 1.1754944e-38, %v1460
  %v1462 = vsel %vm1459, %v1461, %v1457
  %v1463 = vmul.f32 1.0, %v1462
  %1468 = vrot.lane.b32.xlu0 %v1418, 38
  %v1469 = vpop.permute.xlu0 %1468
  %1470 = vrot.lane.b32.xlu0 %v1433, 38
  %v1471 = vpop.permute.xlu0 %1470
  %1472 = vrot.lane.b32.xlu0 %v1448, 38
  %v1473 = vpop.permute.xlu0 %1472
  %1474 = vrot.lane.b32.xlu0 %v1463, 38
  %v1475 = vpop.permute.xlu0 %1474
  %1477 = vrot.lane.b32.xlu0 %v50, 120
  %v1478 = vpop.permute.xlu0 %1477
  %1479 = vrot.lane.b32.xlu0 %v51, 120
  %v1480 = vpop.permute.xlu0 %1479
  %1483 = vrot.lane.b32.xlu0 %v734, 120
  %v1484 = vpop.permute.xlu0 %1483
  %v1486 = vsel %vm735, %v1469, 0
  %v1488 = vsel %vm735, %v1471, 0
  %v1490 = vsel %vm735, %v1473, 0
  %v1492 = vsel %vm735, %v1475, 0
  %v1494 = vsel %vm160, %v1480, 0
  %1496 = vmatpush.msra.mxu0 0.0
  %1497 = vmatpush.msra.mxu0 0.0
  %1498 = vmatpush.msra.mxu0 0.0
  %1499 = vmatpush.msra.mxu0 0.0
  %1500 = vmatpush.msra.mxu0 0.0
  %1501 = vmatpush.msra.mxu0 0.0
  %1502 = vmatpush.msra.mxu0 0.0
  %1503 = vmatpush.msra.mxu0 0.0
  %1504 = vmatpush.msra.mxu0 0.0
  %1505 = vmatpush.msra.mxu0 0.0
  %1506 = vmatpush.msra.mxu0 0.0
  %1507 = vmatpush.msra.mxu0 0.0
  %1508 = vmatpush.msra.mxu0 0.0
  %1509 = vmatpush.msra.mxu0 0.0
  %1510 = vmatpush.msra.mxu0 %v1494
  %1511 = vmatpush.msra.mxu0 %v1478
  %1512 = vmatmul.f32.gmra.mxu0 %v1486
  %v1513 = vpop.f32.mrf.mxu0
  %v1514 = vadd.f32 %v1484, %v1513
  %1515 = vmatmul.f32.gmra.mxu0 %v1488
  %v1516 = vpop.f32.mrf.mxu0
  %v1517 = vadd.f32 %v1484, %v1516
  %1518 = vmatmul.f32.gmra.mxu0 %v1490
  %v1519 = vpop.f32.mrf.mxu0
  %v1520 = vadd.f32 %v1484, %v1519
  %1521 = vmatmul.f32.gmra.mxu0 %v1492
  %v1522 = vpop.f32.mrf.mxu0
  %v1523 = vadd.f32 %v1484, %v1522
  %1524 = vdwg.mxu0
  %v1525 = vxor.u32 %v1514, 2147483648
  %v1526 = vxor.u32 %v1517, 2147483648
  %v1527 = vxor.u32 %v1520, 2147483648
  %v1528 = vxor.u32 %v1523, 2147483648
  %v1529 = vmul.f32 %v1525, 1.442695
  %v1530 = vpow.pop %v1529
  %v1531 = vmul.f32 %v1526, 1.442695
  %v1532 = vpow.pop %v1531
  %v1533 = vmul.f32 %v1527, 1.442695
  %v1534 = vpow.pop %v1533
  %v1535 = vmul.f32 %v1528, 1.442695
  %v1536 = vpow.pop %v1535
  %v1537 = vadd.f32 %v1530, 1.0
  %v1538 = vadd.f32 %v1532, 1.0
  %v1539 = vadd.f32 %v1534, 1.0
  %v1540 = vadd.f32 %v1536, 1.0
  %v1541 = vrcp.pop %v1537
  %v1542 = vmul.f32 %v1537, %v1541
  %v1543 = vsub.f32 1.0, %v1542
  %v1544 = vmul.f32 %v1541, %v1543
  %v1545 = vadd.f32 %v1541, %v1544
  %vm1546 = vweird.f32 %v1537
  %vm1547 = vweird.f32 %v1541
  %vm1548 = vmor %vm1546, %vm1547
  %v1549 = vsel %vm1548, %v1541, %v1545
  %v1550 = vand.u32 2147483647, %v1537
  %vm1551 = vcmp.eq.f32.partialorder %v1550, 8.507059e+37
  %v1552 = vand.u32 %v1537, 2147483648
  %v1553 = vor.u32 1.1754944e-38, %v1552
  %v1554 = vsel %vm1551, %v1553, %v1549
  %v1555 = vmul.f32 1.0, %v1554
  %v1556 = vrcp.pop %v1538
  %v1557 = vmul.f32 %v1538, %v1556
  %v1558 = vsub.f32 1.0, %v1557
  %v1559 = vmul.f32 %v1556, %v1558
  %v1560 = vadd.f32 %v1556, %v1559
  %vm1561 = vweird.f32 %v1538
  %vm1562 = vweird.f32 %v1556
  %vm1563 = vmor %vm1561, %vm1562
  %v1564 = vsel %vm1563, %v1556, %v1560
  %v1565 = vand.u32 2147483647, %v1538
  %vm1566 = vcmp.eq.f32.partialorder %v1565, 8.507059e+37
  %v1567 = vand.u32 %v1538, 2147483648
  %v1568 = vor.u32 1.1754944e-38, %v1567
  %v1569 = vsel %vm1566, %v1568, %v1564
  %v1570 = vmul.f32 1.0, %v1569
  %v1571 = vrcp.pop %v1539
  %v1572 = vmul.f32 %v1539, %v1571
  %v1573 = vsub.f32 1.0, %v1572
  %v1574 = vmul.f32 %v1571, %v1573
  %v1575 = vadd.f32 %v1571, %v1574
  %vm1576 = vweird.f32 %v1539
  %vm1577 = vweird.f32 %v1571
  %vm1578 = vmor %vm1576, %vm1577
  %v1579 = vsel %vm1578, %v1571, %v1575
  %v1580 = vand.u32 2147483647, %v1539
  %vm1581 = vcmp.eq.f32.partialorder %v1580, 8.507059e+37
  %v1582 = vand.u32 %v1539, 2147483648
  %v1583 = vor.u32 1.1754944e-38, %v1582
  %v1584 = vsel %vm1581, %v1583, %v1579
  %v1585 = vmul.f32 1.0, %v1584
  %v1586 = vrcp.pop %v1540
  %v1587 = vmul.f32 %v1540, %v1586
  %v1588 = vsub.f32 1.0, %v1587
  %v1589 = vmul.f32 %v1586, %v1588
  %v1590 = vadd.f32 %v1586, %v1589
  %vm1591 = vweird.f32 %v1540
  %vm1592 = vweird.f32 %v1586
  %vm1593 = vmor %vm1591, %vm1592
  %v1594 = vsel %vm1593, %v1586, %v1590
  %v1595 = vand.u32 2147483647, %v1540
  %vm1596 = vcmp.eq.f32.partialorder %v1595, 8.507059e+37
  %v1597 = vand.u32 %v1540, 2147483648
  %v1598 = vor.u32 1.1754944e-38, %v1597
  %v1599 = vsel %vm1596, %v1598, %v1594
  %v1600 = vmul.f32 1.0, %v1599
  %1601 = vrot.lane.b32.xlu0 %v861, 120
  %v1602 = vpop.permute.xlu0 %1601
  %1605 = vrot.lane.b32.xlu0 %v856, 120
  %v1606 = vpop.permute.xlu0 %1605
  %v1609 = vsel %vm434, %v1555, 0
  %v1612 = vsel %vm434, %v1570, 0
  %v1615 = vsel %vm434, %v1585, 0
  %v1618 = vsel %vm434, %v1600, 0
  %1620 = vmatpush.msra.mxu0 0.0
  %1621 = vmatpush.msra.mxu0 0.0
  %1622 = vmatpush.msra.mxu0 0.0
  %1623 = vmatpush.msra.mxu0 0.0
  %1624 = vmatpush.msra.mxu0 0.0
  %1625 = vmatpush.msra.mxu0 0.0
  %1626 = vmatpush.msra.mxu0 0.0
  %1627 = vmatpush.msra.mxu0 0.0
  %1628 = vmatpush.msra.mxu0 0.0
  %1629 = vmatpush.msra.mxu0 0.0
  %1630 = vmatpush.msra.mxu0 0.0
  %1631 = vmatpush.msra.mxu0 0.0
  %1632 = vmatpush.msra.mxu0 0.0
  %1633 = vmatpush.msra.mxu0 0.0
  %1634 = vmatpush.msra.mxu0 0.0
  %1635 = vmatpush.msra.mxu0 %v1602
  %1636 = vmatmul.f32.gmra.mxu0 %v1609
  %v1637 = vpop.f32.mrf.mxu0
  %v1638 = vadd.f32 %v1606, %v1637
  %1639 = vmatmul.f32.gmra.mxu0 %v1612
  %v1640 = vpop.f32.mrf.mxu0
  %v1641 = vadd.f32 %v1606, %v1640
  %1642 = vmatmul.f32.gmra.mxu0 %v1615
  %v1643 = vpop.f32.mrf.mxu0
  %v1644 = vadd.f32 %v1606, %v1643
  %1645 = vmatmul.f32.gmra.mxu0 %v1618
  %v1646 = vpop.f32.mrf.mxu0
  %v1647 = vadd.f32 %v1606, %v1646
  %1648 = vdwg.mxu0
  %1653 = vrot.lane.b32.xlu0 %v1638, 10
  %v1654 = vpop.permute.xlu0 %1653
  %1655 = vrot.lane.b32.xlu0 %v1641, 10
  %v1656 = vpop.permute.xlu0 %1655
  %1657 = vrot.lane.b32.xlu0 %v1644, 10
  %v1658 = vpop.permute.xlu0 %1657
  %1659 = vrot.lane.b32.xlu0 %v1647, 10
  %v1660 = vpop.permute.xlu0 %1659
  %v1665 = vmul.f32 %v904, %v1654
  %v1666 = vmul.f32 %v905, %v1656
  %v1667 = vmul.f32 %v906, %v1658
  %v1668 = vmul.f32 %v907, %v1660
  %v1669 = vtanh.pop %v1665
  %v1670 = vtanh.pop %v1666
  %v1671 = vtanh.pop %v1667
  %v1672 = vtanh.pop %v1668
  %1677 = vrot.lane.b32.xlu0 %v1669, 118
  %v1678 = vpop.permute.xlu0 %1677
  %1679 = vrot.lane.b32.xlu0 %v1670, 118
  %v1680 = vpop.permute.xlu0 %1679
  %1681 = vrot.lane.b32.xlu0 %v1671, 118
  %v1682 = vpop.permute.xlu0 %1681
  %1683 = vrot.lane.b32.xlu0 %v1672, 118
  %v1684 = vpop.permute.xlu0 %1683
  %v1685 = vsel %vm434, %v1678, 0
  %v1687 = vsel %vm434, %v1680, 0
  %v1689 = vsel %vm434, %v1682, 0
  %v1691 = vsel %vm434, %v1684, 0
  %1693 = vmatpush.xpose.msra.mxu0 0.0
  %1694 = vmatpush.xpose.msra.mxu0 0.0
  %1695 = vmatpush.xpose.msra.mxu0 0.0
  %1696 = vmatpush.xpose.msra.mxu0 0.0
  %1697 = vmatpush.xpose.msra.mxu0 0.0
  %1698 = vmatpush.xpose.msra.mxu0 0.0
  %1699 = vmatpush.xpose.msra.mxu0 0.0
  %1700 = vmatpush.xpose.msra.mxu0 0.0
  %1701 = vmatpush.xpose.msra.mxu0 0.0
  %1702 = vmatpush.xpose.msra.mxu0 0.0
  %1703 = vmatpush.xpose.msra.mxu0 0.0
  %1704 = vmatpush.xpose.msra.mxu0 0.0
  %1705 = vmatpush.xpose.msra.mxu0 %v1691
  %1706 = vmatpush.xpose.msra.mxu0 %v1689
  %1707 = vmatpush.xpose.msra.mxu0 %v1687
  %1708 = vmatpush.xpose.msra.mxu0 %v1685
  %1709 = vmatmul.f32.gmra.mxu0 %v1685
  %v1710 = vpop.f32.mrf.mxu0
  %v1711 = vadd.f32 0.0, %v1710
  %1712 = vmatmul.f32.gmra.mxu0 %v1687
  %v1713 = vpop.f32.mrf.mxu0
  %v1714 = vadd.f32 0.0, %v1713
  %1715 = vmatmul.f32.gmra.mxu0 %v1689
  %v1716 = vpop.f32.mrf.mxu0
  %v1717 = vadd.f32 0.0, %v1716
  %1718 = vmatmul.f32.gmra.mxu0 %v1691
  %v1719 = vpop.f32.mrf.mxu0
  %v1720 = vadd.f32 0.0, %v1719
  %1721 = vdwg.mxu0
  %v1722 = vmul.f32 %v1711, 3.0
  %v1723 = vmul.f32 %v1714, 3.0
  %v1724 = vmul.f32 %v1717, 3.0
  %v1725 = vmul.f32 %v1720, 3.0
  %v1726 = vtanh.pop %v1722
  %v1727 = vtanh.pop %v1723
  %v1728 = vtanh.pop %v1724
  %v1729 = vtanh.pop %v1725
  %v1730 = vmax.f32 %v1726, 0.0
  %v1731 = vmax.f32 %v1727, 0.0
  %v1732 = vmax.f32 %v1728, 0.0
  %v1733 = vmax.f32 %v1729, 0.0
  %v1734 = vmul.f32 %v38, %v1730
  %v1735 = vmul.f32 %v39, %v1731
  %v1736 = vmul.f32 %v40, %v1732
  %v1737 = vmul.f32 %v41, %v1733
  %1742 = vrot.lane.b32.xlu0 %v1375, 118
  %v1743 = vpop.permute.xlu0 %1742
  %1744 = vrot.lane.b32.xlu0 %v1376, 118
  %v1745 = vpop.permute.xlu0 %1744
  %1746 = vrot.lane.b32.xlu0 %v1377, 118
  %v1747 = vpop.permute.xlu0 %1746
  %1748 = vrot.lane.b32.xlu0 %v1378, 118
  %v1749 = vpop.permute.xlu0 %1748
  %v1754 = vmul.f32 %v54, %v1743
  %v1755 = vmul.f32 %v56, %v1745
  %v1756 = vmul.f32 %v58, %v1747
  %v1757 = vmul.f32 %v60, %v1749
  %1762 = vrot.lane.b32.xlu0 %v1754, 112
  %v1763 = vpop.permute.xlu0 %1762
  %1764 = vrot.lane.b32.xlu0 %v1755, 112
  %v1765 = vpop.permute.xlu0 %1764
  %1766 = vrot.lane.b32.xlu0 %v1756, 112
  %v1767 = vpop.permute.xlu0 %1766
  %1768 = vrot.lane.b32.xlu0 %v1757, 112
  %v1769 = vpop.permute.xlu0 %1768
  %1778 = vrot.lane.b32.xlu0 %v61, 112
  %v1779 = vpop.permute.xlu0 %1778
  %1780 = vrot.lane.b32.xlu0 %v62, 112
  %v1781 = vpop.permute.xlu0 %1780
  %1782 = vrot.lane.b32.xlu0 %v63, 112
  %v1783 = vpop.permute.xlu0 %1782
  %1784 = vrot.lane.b32.xlu0 %v64, 112
  %v1785 = vpop.permute.xlu0 %1784
  %1786 = vrot.lane.b32.xlu0 %v65, 112
  %v1787 = vpop.permute.xlu0 %1786
  %1788 = vrot.lane.b32.xlu0 %v66, 112
  %v1789 = vpop.permute.xlu0 %1788
  %1790 = vrot.lane.b32.xlu0 %v67, 112
  %v1791 = vpop.permute.xlu0 %1790
  %1792 = vrot.lane.b32.xlu0 %v68, 112
  %v1793 = vpop.permute.xlu0 %1792
  %vm1802 = vcmask 523264
  %v1803 = vsel %vm1802, %v1763, 0
  %v1805 = vsel %vm1802, %v1765, 0
  %v1807 = vsel %vm1802, %v1767, 0
  %v1809 = vsel %vm1802, %v1769, 0
  %1811 = vmatpush.msra.mxu0 0.0
  %1812 = vmatpush.msra.mxu0 0.0
  %1813 = vmatpush.msra.mxu0 0.0
  %1814 = vmatpush.msra.mxu0 0.0
  %1815 = vmatpush.msra.mxu0 0.0
  %1816 = vmatpush.msra.mxu0 0.0
  %1817 = vmatpush.msra.mxu0 0.0
  %1818 = vmatpush.msra.mxu0 0.0
  %1819 = vmatpush.msra.mxu0 %v1793
  %1820 = vmatpush.msra.mxu0 %v1791
  %1821 = vmatpush.msra.mxu0 %v1789
  %1822 = vmatpush.msra.mxu0 %v1787
  %1823 = vmatpush.msra.mxu0 %v1785
  %1824 = vmatpush.msra.mxu0 %v1783
  %1825 = vmatpush.msra.mxu0 %v1781
  %1826 = vmatpush.msra.mxu0 %v1779
  %1827 = vmatmul.f32.gmra.mxu0 %v1803
  %v1828 = vpop.f32.mrf.mxu0
  %v1829 = vadd.f32 0.0, %v1828
  %1830 = vmatmul.f32.gmra.mxu0 %v1805
  %v1831 = vpop.f32.mrf.mxu0
  %v1832 = vadd.f32 0.0, %v1831
  %1833 = vmatmul.f32.gmra.mxu0 %v1807
  %v1834 = vpop.f32.mrf.mxu0
  %v1835 = vadd.f32 0.0, %v1834
  %1836 = vmatmul.f32.gmra.mxu0 %v1809
  %v1837 = vpop.f32.mrf.mxu0
  %v1838 = vadd.f32 0.0, %v1837
  %1839 = vdwg.mxu0
  %1844 = vrot.lane.b32.xlu0 %v1829, 80
  %v1845 = vpop.permute.xlu0 %1844
  %1846 = vrot.lane.b32.xlu0 %v1832, 80
  %v1847 = vpop.permute.xlu0 %1846
  %1848 = vrot.lane.b32.xlu0 %v1835, 80
  %v1849 = vpop.permute.xlu0 %1848
  %1850 = vrot.lane.b32.xlu0 %v1838, 80
  %v1851 = vpop.permute.xlu0 %1850
  %v1856 = vadd.f32 %v54, %v1845
  %v1857 = vadd.f32 %v56, %v1847
  %v1858 = vadd.f32 %v58, %v1849
  %v1859 = vadd.f32 %v60, %v1851
  %1860 = vrot.lane.b32.xlu0 %v1375, 28
  %v1861 = vpop.permute.xlu0 %1860
  %1862 = vrot.lane.b32.xlu0 %v1376, 28
  %v1863 = vpop.permute.xlu0 %1862
  %1864 = vrot.lane.b32.xlu0 %v1377, 28
  %v1865 = vpop.permute.xlu0 %1864
  %1866 = vrot.lane.b32.xlu0 %v1378, 28
  %v1867 = vpop.permute.xlu0 %1866
  %v1873 = vsel %vm77, %v1734, 0
  %v1876 = vsel %vm77, %v1735, 0
  %v1879 = vsel %vm77, %v1736, 0
  %v1882 = vsel %vm77, %v1737, 0
  %1884 = vmatpush.msra.mxu0 0.0
  %1885 = vmatpush.msra.mxu0 0.0
  %1886 = vmatpush.msra.mxu0 0.0
  %1887 = vmatpush.msra.mxu0 0.0
  %1888 = vmatpush.msra.mxu0 0.0
  %1889 = vmatpush.msra.mxu0 0.0
  %1890 = vmatpush.msra.mxu0 0.0
  %1891 = vmatpush.msra.mxu0 0.0
  %1892 = vmatpush.msra.mxu0 0.0
  %1893 = vmatpush.msra.mxu0 0.0
  %1894 = vmatpush.msra.mxu0 0.0
  %1895 = vmatpush.msra.mxu0 0.0
  %1896 = vmatpush.msra.mxu0 %v1867
  %1897 = vmatpush.msra.mxu0 %v1865
  %1898 = vmatpush.msra.mxu0 %v1863
  %1899 = vmatpush.msra.mxu0 %v1861
  %1900 = vmatmul.f32.gmra.mxu0 %v1873
  %v1901 = vpop.f32.mrf.mxu0
  %v1902 = vadd.f32 0.0, %v1901
  %1903 = vmatmul.f32.gmra.mxu0 %v1876
  %v1904 = vpop.f32.mrf.mxu0
  %v1905 = vadd.f32 0.0, %v1904
  %1906 = vmatmul.f32.gmra.mxu0 %v1879
  %v1907 = vpop.f32.mrf.mxu0
  %v1908 = vadd.f32 0.0, %v1907
  %1909 = vmatmul.f32.gmra.mxu0 %v1882
  %v1910 = vpop.f32.mrf.mxu0
  %v1911 = vadd.f32 0.0, %v1910
  %1912 = vdwg.mxu0
  %1917 = vrot.lane.b32.xlu0 %v1902, 80
  %v1918 = vpop.permute.xlu0 %1917
  %1919 = vrot.lane.b32.xlu0 %v1905, 80
  %v1920 = vpop.permute.xlu0 %1919
  %1921 = vrot.lane.b32.xlu0 %v1908, 80
  %v1922 = vpop.permute.xlu0 %1921
  %1923 = vrot.lane.b32.xlu0 %v1911, 80
  %v1924 = vpop.permute.xlu0 %1923
  %v1929 = vadd.f32 %v1856, %v1918
  %v1930 = vadd.f32 %v1857, %v1920
  %v1931 = vadd.f32 %v1858, %v1922
  %v1932 = vadd.f32 %v1859, %v1924
  %v1933 = vtanh.pop %v1929
  %v1934 = vtanh.pop %v1930
  %v1935 = vtanh.pop %v1931
  %v1936 = vtanh.pop %v1932
  %1937 = vrot.lane.b32.xlu0 %v26, 6
  %v1938 = vpop.permute.xlu0 %1937
  %1939 = vrot.lane.b32.xlu0 %v27, 6
  %v1940 = vpop.permute.xlu0 %1939
  %1941 = vrot.lane.b32.xlu0 %v28, 6
  %v1942 = vpop.permute.xlu0 %1941
  %1943 = vrot.lane.b32.xlu0 %v29, 6
  %v1944 = vpop.permute.xlu0 %1943
  %v1949 = vmul.f32 %v1129, %v1938
  %v1950 = vmul.f32 %v1144, %v1940
  %v1951 = vmul.f32 %v1159, %v1942
  %v1952 = vmul.f32 %v1174, %v1944
  %v1953 = vsub.f32 1.0, %v1129
  %v1954 = vsub.f32 1.0, %v1144
  %v1955 = vsub.f32 1.0, %v1159
  %v1956 = vsub.f32 1.0, %v1174
  %1961 = vrot.lane.b32.xlu0 %v1933, 56
  %v1962 = vpop.permute.xlu0 %1961
  %1963 = vrot.lane.b32.xlu0 %v1934, 56
  %v1964 = vpop.permute.xlu0 %1963
  %1965 = vrot.lane.b32.xlu0 %v1935, 56
  %v1966 = vpop.permute.xlu0 %1965
  %1967 = vrot.lane.b32.xlu0 %v1936, 56
  %v1968 = vpop.permute.xlu0 %1967
  %v1973 = vmul.f32 %v1953, %v1962
  %v1974 = vmul.f32 %v1954, %v1964
  %v1975 = vmul.f32 %v1955, %v1966
  %v1976 = vmul.f32 %v1956, %v1968
  %v1977 = vadd.f32 %v1949, %v1973
  %v1978 = vadd.f32 %v1950, %v1974
  %v1979 = vadd.f32 %v1951, %v1975
  %v1980 = vadd.f32 %v1952, %v1976
  %1985 = vrot.lane.b32.xlu0 %v1977, 120
  %v1986 = vpop.permute.xlu0 %1985
  %1987 = vrot.lane.b32.xlu0 %v1978, 120
  %v1988 = vpop.permute.xlu0 %1987
  %1989 = vrot.lane.b32.xlu0 %v1979, 120
  %v1990 = vpop.permute.xlu0 %1989
  %1991 = vrot.lane.b32.xlu0 %v1980, 120
  %v1992 = vpop.permute.xlu0 %1991
  %1997 = vst.msk [vmem:[%s7] sm:$0xff] %vm434, %v1986
  %1998 = vst.msk [vmem:[%s7 + $0x8] sm:$0xff] %vm434, %v1988
  %1999 = vst.msk [vmem:[%s7 + $0x10] sm:$0xff] %vm434, %v1990
  %2000 = vst.msk [vmem:[%s7 + $0x18] sm:$0xff] %vm434, %v1992
  // Predicated region
  $region30: #{agcrn_cell_forward.1} parent=0 // pred_check
    _
  $region31: #{agcrn_cell_forward.1} parent=0 // pred_check_branch
    %2002 = sbr.rel (0) target = $region33
  $region32: #{agcrn_cell_forward.1} parent=0 // pred_region
    _
  $region33: #{agcrn_cell_forward.1} parent=0 // pred_fallthru
    _
  // Predicated region
  $region34: #{agcrn_cell_forward.1} parent=0 // pred_check
    _
  $region35: #{agcrn_cell_forward.1} parent=0 // pred_check_branch
    %2004 = sbr.rel (0) target = $region37
  $region36: #{agcrn_cell_forward.1} parent=0 // pred_region
    _
  $region37: #{agcrn_cell_forward.1} parent=0 // pred_fallthru
    _

</llo_original>
